<compile_context>
chip_gen: v7x
topology: tpu7x:2x2x1
jax: 0.10.0
libtpu: 0.0.40
codegen_flags: <defaults>
</compile_context>

<pallas_src>
import functools

import jax
import jax.numpy as jnp
from jax.experimental import pallas as pl
from jax.experimental.pallas import tpu as pltpu

EPS = 1e-5          # nn.BatchNorm1d default
NEG_SLOPE = 0.01    # nn.LeakyReLU default
LANE = 128


def _supports_single_buffer():
    try:
        pl.BlockSpec((8, LANE), lambda i, j: (0, 0), pipeline_mode=pl.Buffered(1))
        return True
    except Exception:
        return False


_HAS_PIPELINE_MODE = _supports_single_buffer()


def _num_tensorcores():
    try:
        kind = jax.devices()[0].device_kind.lower()
        if "7x" in kind or "v7" in kind:
            return 2                      # v7x: 2 TensorCores per chip
    except Exception:
        pass
    return 1


def _vmem_capacity_bytes():
    try:
        return int(pltpu.get_tpu_info().vmem_capacity_bytes)
    except Exception:
        return 64 * 2**20                 # conservative fallback (v7x-sized VMEM)


def _bn_act(y, gamma, beta, activation):
    """BatchNorm1d (training batch-stats, biased var) + activation, all in f32.

    Single-pass statistics (sum and sum-of-squares in one sweep); var clamped at 0 to guard the
    mild E[y^2]-mean^2 cancellation.  gamma/beta are folded into one per-feature scale/shift.
    """
    inv_n = 1.0 / y.shape[0]
    mean = jnp.sum(y, axis=0, keepdims=True) * inv_n           # (1, TC)
    ex2 = jnp.sum(y * y, axis=0, keepdims=True) * inv_n        # (1, TC)
    var = jnp.maximum(ex2 - mean * mean, 0.0)
    scale = gamma * jax.lax.rsqrt(var + EPS)                   # EUP rsqrt (free slot)
    shift = beta - mean * scale
    y_bn = y * scale + shift                                   # 2 VPU ops per element
    if activation == "tanh":                                   # DRTP mode of the module
        return jnp.tanh(y_bn)
    return jnp.where(y_bn >= 0.0, y_bn, NEG_SLOPE * y_bn)      # LeakyReLU(0.01)


def _kernel_resident(x_ref, w_ref, g_ref, b_ref, o_ref, *, activation):
    # Whole Cin resident: x_ref (N, Cin), w_ref (Cin, TC), g/b (1, TC), o_ref (N, TC).
    # Linear bias intentionally absent: BN's batch-mean subtraction cancels it exactly.
    y = jnp.dot(x_ref[...], w_ref[...], preferred_element_type=jnp.float32)   # MXU, f32 acc
    o_ref[...] = _bn_act(y, g_ref[...], b_ref[...], activation).astype(o_ref.dtype)


def _kernel_ktiled(x_ref, w_ref, g_ref, b_ref, o_ref, acc_ref, *, activation):
    # K-tiled reduction: x_ref (N, TK), w_ref (TK, TC), acc_ref (N, TC) f32 scratch.
    k = pl.program_id(1)

    @pl.when(k == 0)
    def _():
        acc_ref[...] = jnp.zeros_like(acc_ref)

    acc_ref[...] += jnp.dot(x_ref[...], w_ref[...], preferred_element_type=jnp.float32)

    @pl.when(k == pl.num_programs(1) - 1)
    def _():
        # BN stats only on the fully K-accumulated y -> exact batch statistics.
        o_ref[...] = _bn_act(acc_ref[...], g_ref[...], b_ref[...], activation).astype(o_ref.dtype)


def _select_cout_tile(cout_p, fits, ncores):
    cands = [t for t in range(min(cout_p, 512), LANE - 1, -LANE) if cout_p % t == 0]
    fitting = [t for t in cands if fits(t)]
    if not fitting:
        return None
    if ncores > 1:
        balanced = [t for t in fitting if (cout_p // t) % ncores == 0]
        if balanced:
            return balanced[0]            # even tile count keeps both v7x TensorCores busy
    return fitting[0]


def linear_block(x, w_t, gamma, beta, *, activation="leaky_relu",
                 use_bf16_matmul=False, out_dtype=jnp.float32):
    """LinearBlock forward (training-mode BatchNorm batch statistics).

    x: (N, Cin); w_t: (Cin, Cout) pre-transposed nn.Linear weight; gamma/beta: (Cout,) BN affine.
    The linear bias is intentionally NOT an input (batch-stat BN cancels it exactly).
    use_bf16_matmul streams x / W as bf16 (recommended default on v5e); out_dtype=jnp.bfloat16
    halves output VMEM / HBM writeback when the consumer tolerates it.  BN math is always f32.
    """
    # TODO(synk): BatchNorm1d running_mean / running_var updates (stateful training-time side
    # effect of the PyTorch module) are not emitted; only the normalized output is produced.
    N, Cin = x.shape
    Cout = w_t.shape[1]

    # bf16 streaming path: cast in the wrapper so the kernel streams half the (HBM-bound)
    # weight bytes and never re-casts the resident x inside the grid loop.
    if use_bf16_matmul:
        x = x.astype(jnp.bfloat16)
        w_t = w_t.astype(jnp.bfloat16)

    # Lane-dense output: Cout rounded up to a multiple of 128 so stores are unmasked vst.
    # NOTE: store params pre-padded / pre-transposed at init in real models so this pad (a full
    # HBM copy of the weights) and the trailing slice never run on the hot path.
    cout_p = -(-Cout // LANE) * LANE
    if cout_p != Cout:
        pad = cout_p - Cout
        w_t = jnp.pad(w_t, ((0, 0), (0, pad)))
        gamma = jnp.pad(gamma, (0, pad))
        beta = jnp.pad(beta, (0, pad))
    g2 = jnp.asarray(gamma, jnp.float32).reshape(1, cout_p)
    b2 = jnp.asarray(beta, jnp.float32).reshape(1, cout_p)

    x_esz = x.dtype.itemsize
    w_esz = w_t.dtype.itemsize
    o_esz = jnp.dtype(out_dtype).itemsize

    # Generation-aware VMEM budget: ~46 MiB usable on v7x (64 MiB physical), ~92 MiB on v5e/v6e.
    vmem_cap = _vmem_capacity_bytes()
    vmem_limit = min(int(vmem_cap * 0.85), 112 * 2**20)
    budget = int(vmem_limit * 0.85)       # headroom for Mosaic internals / layout padding
    ncores = _num_tensorcores()

    def bytes_needed(tc, tk, nk):
        aff = 2 * 2 * 4 * tc                            # gamma + beta tiles, double-buffered
        out = 2 * o_esz * N * tc                        # output tile, double-buffered
        acc = 0 if nk == 1 else 4 * N * tc              # f32 accumulator scratch
        xb = (1 if nk == 1 else 2) * x_esz * N * tk     # x single-buffered when resident
        wb = 2 * w_esz * tk * tc                        # weight tile, double-buffered
        return aff + out + acc + xb + wb

    # 1) Preferred: whole Cin resident (one K step, x single-buffered, no accumulator).
    cin_p, tk, nk = Cin, Cin, 1
    tc = _select_cout_tile(cout_p, lambda t: bytes_needed(t, Cin, 1) <= budget, ncores)
    if tc is None:
        # 2) K-tile the reduction axis so large Cin / N shapes stay inside VMEM.
        cin_p = -(-Cin // LANE) * LANE
        tk = None
        for cand in range(min(cin_p, 2048), LANE - 1, -LANE):
            if cin_p % cand:
                continue
            tc = _select_cout_tile(
                cout_p, lambda t, _tk=cand: bytes_needed(t, _tk, cin_p // _tk) <= budget, ncores)
            if tc is not None:
                tk = cand
                break
        if tk is None:                                   # last resort: smallest legal tiles
            tc, tk = LANE, LANE
        nk = cin_p // tk
        if cin_p != Cin:                                 # zero-pad reduction dim (no effect on y)
            x = jnp.pad(x, ((0, 0), (0, cin_p - Cin)))
            w_t = jnp.pad(w_t, ((0, cin_p - Cin), (0, 0)))

    n_ct = cout_p // tc
    grid = (n_ct, nk)

    if nk == 1:
        kernel = functools.partial(_kernel_resident, activation=activation)
        scratch = []
    else:
        kernel = functools.partial(_kernel_ktiled, activation=activation)
        scratch = [pltpu.VMEM((N, tc), jnp.float32)]

    w_spec = pl.BlockSpec((tk, tc), lambda j, k: (k, j))
    g_spec = pl.BlockSpec((1, tc), lambda j, k: (0, j))
    b_spec = pl.BlockSpec((1, tc), lambda j, k: (0, j))
    o_spec = pl.BlockSpec((N, tc), lambda j, k: (0, j))

    cost = pl.CostEstimate(
        flops=int(2 * N * cin_p * cout_p),
        transcendentals=int(N * cout_p if activation == "tanh" else 0),
        bytes_accessed=int(x_esz * N * cin_p * (1 if nk == 1 else n_ct)
                           + w_esz * cin_p * cout_p
                           + 2 * 4 * cout_p
                           + o_esz * N * cout_p),
    )

    def run(x_spec):
        return pl.pallas_call(
            kernel,
            out_shape=jax.ShapeDtypeStruct((N, cout_p), out_dtype),
            grid_spec=pltpu.PrefetchScalarGridSpec(
                num_scalar_prefetch=0,
                grid=grid,
                in_specs=[x_spec, w_spec, g_spec, b_spec],
                out_specs=o_spec,
                scratch_shapes=scratch,
            ),
            compiler_params=pltpu.CompilerParams(
                # Cout tiles independent -> 2-TC sharding on v7x; Cin is the reduction -> last.
                dimension_semantics=("parallel", "arbitrary"),
                vmem_limit_bytes=vmem_limit,
            ),
            cost_estimate=cost,
        )(x, w_t, g2, b2)

    x_spec_default = pl.BlockSpec((N, tk), lambda j, k: (0, k))
    if nk == 1 and _HAS_PIPELINE_MODE:
        # Resident x never changes block index -> its second pipeline buffer is pure VMEM waste.
        try:
            out = run(pl.BlockSpec((N, tk), lambda j, k: (0, k),
                                   pipeline_mode=pl.Buffered(1)))
        except Exception:
            out = run(x_spec_default)     # fall back if single-buffering is unsupported
    else:
        out = run(x_spec_default)

    return out[:, :Cout] if cout_p != Cout else out


def reference(x, w_t, b, gamma, beta, activation="leaky_relu"):
    # Faithful to the PyTorch module (Linear WITH bias, BN training batch-stats, LeakyReLU/Tanh).
    y = x @ w_t + b
    mean = jnp.mean(y, axis=0, keepdims=True)
    var = jnp.mean((y - mean) ** 2, axis=0, keepdims=True)
    y = (y - mean) / jnp.sqrt(var + EPS) * gamma + beta
    if activation == "tanh":
        return jnp.tanh(y)
    return jnp.where(y >= 0.0, y, NEG_SLOPE * y)


if __name__ == "__main__":
    # Small, lane-dense shapes: Cout = 3 * 128 exercises the Cout tiling / megacore preference
    # without triggering the (advised-against) per-call pad / slice path.
    N, CIN, COUT = 64, 128, 384

    key = jax.random.PRNGKey(0)
    kx, kw, kb, kg, kbeta = jax.random.split(key, 5)

    x = jax.random.normal(kx, (N, CIN), dtype=jnp.float32)

    # "nn.Linear"-style init (uniform in +-1/sqrt(fan_in)); weight pre-transposed to (Cin, Cout).
    bound = 1.0 / jnp.sqrt(jnp.float32(CIN))
    w_t = jax.random.uniform(kw, (CIN, COUT), minval=-bound, maxval=bound, dtype=jnp.float32)
    b = jax.random.uniform(kb, (COUT,), minval=-bound, maxval=bound, dtype=jnp.float32)

    # BatchNorm affine params (non-trivial to exercise the folded scale/shift math).
    gamma = 1.0 + 0.1 * jax.random.normal(kg, (COUT,), dtype=jnp.float32)
    beta = 0.1 * jax.random.normal(kbeta, (COUT,), dtype=jnp.float32)

    # Default (LeakyReLU) path; reference includes the bias — BN cancels it exactly.
    out = jax.block_until_ready(linear_block(x, w_t, gamma, beta))
    ref = jax.block_until_ready(reference(x, w_t, b, gamma, beta))
    assert out.shape == ref.shape
    assert jnp.allclose(out, ref, atol=1e-4, rtol=1e-4), "leaky_relu mismatch vs reference"

    # DRTP (Tanh) path.
    out_t = jax.block_until_ready(linear_block(x, w_t, gamma, beta, activation="tanh"))
    ref_t = jax.block_until_ready(reference(x, w_t, b, gamma, beta, activation="tanh"))
    assert jnp.allclose(out_t, ref_t, atol=1e-4, rtol=1e-4), "tanh mismatch vs reference"

    print("KERNEL_OK")
</pallas_src>

<mosaic_0001>
module attributes {stable_mosaic.version = 11 : i64} {
  func.func @_kernel_resident(%arg0: i32, %arg1: i32, %arg2: memref<64x128xf32, #tpu.memory_space<vmem>>, %arg3: memref<128x384xf32, #tpu.memory_space<vmem>>, %arg4: memref<1x384xf32, #tpu.memory_space<vmem>>, %arg5: memref<1x384xf32, #tpu.memory_space<vmem>>, %arg6: memref<64x384xf32, #tpu.memory_space<vmem>>) attributes {dimension_semantics = [#tpu.dimension_semantics<parallel>, #tpu.dimension_semantics<arbitrary>], iteration_bounds = array<i64: 1, 1>, scalar_prefetch = 0 : i64, scratch_operands = 0 : i64, tpu.core_type = #tpu.core_type<tc>, window_params = [{pipeline_mode = #tpu.pipeline_mode<synchronous>, transform_indices = @transform_0, window_bounds = array<i64: 64, 128>}, {transform_indices = @transform_1, window_bounds = array<i64: 128, 384>}, {transform_indices = @transform_2, window_bounds = array<i64: 1, 384>}, {transform_indices = @transform_3, window_bounds = array<i64: 1, 384>}, {transform_indices = @transform_4, window_bounds = array<i64: 64, 384>}]} {
    %c0 = arith.constant 0 : index
    %c0_0 = arith.constant 0 : index
    %0 = vector.load %arg2[%c0, %c0_0] : memref<64x128xf32, #tpu.memory_space<vmem>>, vector<64x128xf32>
    %c0_1 = arith.constant 0 : index
    %c0_2 = arith.constant 0 : index
    %1 = vector.load %arg3[%c0_1, %c0_2] : memref<128x384xf32, #tpu.memory_space<vmem>>, vector<128x384xf32>
    %cst = arith.constant dense<0.000000e+00> : vector<64x384xf32>
    %2 = tpu.matmul %0, %1, %cst {dimension_numbers = #tpu.dot_dimension_numbers<[1], [0], [0], [1], [0, 0, 1, 1], [], []>} : vector<64x128xf32>, vector<128x384xf32>, vector<64x384xf32> -> vector<64x384xf32>
    %c0_3 = arith.constant 0 : index
    %c0_4 = arith.constant 0 : index
    %3 = vector.load %arg4[%c0_3, %c0_4] : memref<1x384xf32, #tpu.memory_space<vmem>>, vector<1x384xf32>
    %c0_5 = arith.constant 0 : index
    %c0_6 = arith.constant 0 : index
    %4 = vector.load %arg5[%c0_5, %c0_6] : memref<1x384xf32, #tpu.memory_space<vmem>>, vector<1x384xf32>
    %cst_7 = arith.constant dense<0.000000e+00> : vector<384xf32>
    %5 = vector.multi_reduction <add>, %2, %cst_7 [0] : vector<64x384xf32> to vector<384xf32>
    %6 = vector.shape_cast %5 : vector<384xf32> to vector<1x384xf32>
    %cst_8 = arith.constant 1.562500e-02 : f32
    %7 = vector.broadcast %cst_8 : f32 to vector<1x384xf32>
    %8 = arith.mulf %6, %7 : vector<1x384xf32>
    %9 = arith.mulf %2, %2 : vector<64x384xf32>
    %cst_9 = arith.constant dense<0.000000e+00> : vector<384xf32>
    %10 = vector.multi_reduction <add>, %9, %cst_9 [0] : vector<64x384xf32> to vector<384xf32>
    %11 = vector.shape_cast %10 : vector<384xf32> to vector<1x384xf32>
    %cst_10 = arith.constant 1.562500e-02 : f32
    %12 = vector.broadcast %cst_10 : f32 to vector<1x384xf32>
    %13 = arith.mulf %11, %12 : vector<1x384xf32>
    %14 = arith.mulf %8, %8 : vector<1x384xf32>
    %15 = arith.subf %13, %14 : vector<1x384xf32>
    %cst_11 = arith.constant 0.000000e+00 : f32
    %16 = vector.broadcast %cst_11 : f32 to vector<1x384xf32>
    %17 = arith.maximumf %15, %16 : vector<1x384xf32>
    %cst_12 = arith.constant 9.99999974E-6 : f32
    %18 = vector.broadcast %cst_12 : f32 to vector<1x384xf32>
    %19 = arith.addf %17, %18 : vector<1x384xf32>
    %20 = math.rsqrt %19 : vector<1x384xf32>
    %21 = arith.mulf %3, %20 : vector<1x384xf32>
    %22 = arith.mulf %8, %21 : vector<1x384xf32>
    %23 = arith.subf %4, %22 : vector<1x384xf32>
    %24 = vector.broadcast %21 : vector<1x384xf32> to vector<64x384xf32>
    %25 = arith.mulf %2, %24 : vector<64x384xf32>
    %26 = vector.broadcast %23 : vector<1x384xf32> to vector<64x384xf32>
    %27 = arith.addf %25, %26 : vector<64x384xf32>
    %cst_13 = arith.constant 0.000000e+00 : f32
    %28 = vector.broadcast %cst_13 : f32 to vector<64x384xf32>
    %29 = arith.cmpf oge, %27, %28 : vector<64x384xf32>
    %cst_14 = arith.constant 0.00999999977 : f32
    %30 = vector.broadcast %cst_14 : f32 to vector<64x384xf32>
    %31 = arith.mulf %30, %27 : vector<64x384xf32>
    %32 = arith.select %29, %27, %31 : vector<64x384xi1>, vector<64x384xf32>
    %c0_15 = arith.constant 0 : index
    %c0_16 = arith.constant 0 : index
    %33 = vector.load %arg6[%c0_15, %c0_16] : memref<64x384xf32, #tpu.memory_space<vmem>>, vector<64x384xf32>
    tpu.vector_store %arg6[%c0_15, %c0_16], %32 {strides = array<i32>} : memref<64x384xf32, #tpu.memory_space<vmem>>, vector<64x384xf32>,
    return
  }
  func.func @transform_0(%arg0: i32, %arg1: i32) -> (i32, i32) {
    %c0_i32 = arith.constant 0 : i32
    %c0_i32_0 = arith.constant 0 : i32
    return %c0_i32, %arg1 : i32, i32
  }
  func.func @transform_1(%arg0: i32, %arg1: i32) -> (i32, i32) {
    %c0_i32 = arith.constant 0 : i32
    return %arg1, %arg0 : i32, i32
  }
  func.func @transform_2(%arg0: i32, %arg1: i32) -> (i32, i32) {
    %c0_i32 = arith.constant 0 : i32
    %c0_i32_0 = arith.constant 0 : i32
    return %c0_i32, %arg0 : i32, i32
  }
  func.func @transform_3(%arg0: i32, %arg1: i32) -> (i32, i32) {
    %c0_i32 = arith.constant 0 : i32
    %c0_i32_0 = arith.constant 0 : i32
    return %c0_i32, %arg0 : i32, i32
  }
  func.func @transform_4(%arg0: i32, %arg1: i32) -> (i32, i32) {
    %c0_i32 = arith.constant 0 : i32
    %c0_i32_0 = arith.constant 0 : i32
    return %c0_i32, %arg0 : i32, i32
  }
}

module attributes {stable_mosaic.version = 11 : i64} {
  func.func @_kernel_resident(%arg0: i32, %arg1: i32, %arg2: memref<64x128xf32, #tpu.memory_space<vmem>>, %arg3: memref<128x384xf32, #tpu.memory_space<vmem>>, %arg4: memref<1x384xf32, #tpu.memory_space<vmem>>, %arg5: memref<1x384xf32, #tpu.memory_space<vmem>>, %arg6: memref<64x384xf32, #tpu.memory_space<vmem>>) attributes {dimension_semantics = [#tpu.dimension_semantics<parallel>, #tpu.dimension_semantics<arbitrary>], iteration_bounds = array<i64: 1, 1>, scalar_prefetch = 0 : i64, scratch_operands = 0 : i64, tpu.core_type = #tpu.core_type<tc>, window_params = [{transform_indices = @transform_0, window_bounds = array<i64: 64, 128>}, {transform_indices = @transform_1, window_bounds = array<i64: 128, 384>}, {transform_indices = @transform_2, window_bounds = array<i64: 1, 384>}, {transform_indices = @transform_3, window_bounds = array<i64: 1, 384>}, {transform_indices = @transform_4, window_bounds = array<i64: 64, 384>}]} {
    %c0 = arith.constant 0 : index
    %c0_0 = arith.constant 0 : index
    %0 = vector.load %arg2[%c0, %c0_0] : memref<64x128xf32, #tpu.memory_space<vmem>>, vector<64x128xf32>
    %c0_1 = arith.constant 0 : index
    %c0_2 = arith.constant 0 : index
    %1 = vector.load %arg3[%c0_1, %c0_2] : memref<128x384xf32, #tpu.memory_space<vmem>>, vector<128x384xf32>
    %cst = arith.constant dense<0.000000e+00> : vector<64x384xf32>
    %2 = tpu.matmul %0, %1, %cst {dimension_numbers = #tpu.dot_dimension_numbers<[1], [0], [0], [1], [0, 0, 1, 1], [], []>} : vector<64x128xf32>, vector<128x384xf32>, vector<64x384xf32> -> vector<64x384xf32>
    %c0_3 = arith.constant 0 : index
    %c0_4 = arith.constant 0 : index
    %3 = vector.load %arg4[%c0_3, %c0_4] : memref<1x384xf32, #tpu.memory_space<vmem>>, vector<1x384xf32>
    %c0_5 = arith.constant 0 : index
    %c0_6 = arith.constant 0 : index
    %4 = vector.load %arg5[%c0_5, %c0_6] : memref<1x384xf32, #tpu.memory_space<vmem>>, vector<1x384xf32>
    %cst_7 = arith.constant dense<0.000000e+00> : vector<384xf32>
    %5 = vector.multi_reduction <add>, %2, %cst_7 [0] : vector<64x384xf32> to vector<384xf32>
    %6 = vector.shape_cast %5 : vector<384xf32> to vector<1x384xf32>
    %cst_8 = arith.constant 1.562500e-02 : f32
    %7 = vector.broadcast %cst_8 : f32 to vector<1x384xf32>
    %8 = arith.mulf %6, %7 : vector<1x384xf32>
    %9 = arith.mulf %2, %2 : vector<64x384xf32>
    %cst_9 = arith.constant dense<0.000000e+00> : vector<384xf32>
    %10 = vector.multi_reduction <add>, %9, %cst_9 [0] : vector<64x384xf32> to vector<384xf32>
    %11 = vector.shape_cast %10 : vector<384xf32> to vector<1x384xf32>
    %cst_10 = arith.constant 1.562500e-02 : f32
    %12 = vector.broadcast %cst_10 : f32 to vector<1x384xf32>
    %13 = arith.mulf %11, %12 : vector<1x384xf32>
    %14 = arith.mulf %8, %8 : vector<1x384xf32>
    %15 = arith.subf %13, %14 : vector<1x384xf32>
    %cst_11 = arith.constant 0.000000e+00 : f32
    %16 = vector.broadcast %cst_11 : f32 to vector<1x384xf32>
    %17 = arith.maximumf %15, %16 : vector<1x384xf32>
    %cst_12 = arith.constant 9.99999974E-6 : f32
    %18 = vector.broadcast %cst_12 : f32 to vector<1x384xf32>
    %19 = arith.addf %17, %18 : vector<1x384xf32>
    %20 = math.rsqrt %19 : vector<1x384xf32>
    %21 = arith.mulf %3, %20 : vector<1x384xf32>
    %22 = arith.mulf %8, %21 : vector<1x384xf32>
    %23 = arith.subf %4, %22 : vector<1x384xf32>
    %24 = vector.broadcast %21 : vector<1x384xf32> to vector<64x384xf32>
    %25 = arith.mulf %2, %24 : vector<64x384xf32>
    %26 = vector.broadcast %23 : vector<1x384xf32> to vector<64x384xf32>
    %27 = arith.addf %25, %26 : vector<64x384xf32>
    %cst_13 = arith.constant 0.000000e+00 : f32
    %28 = vector.broadcast %cst_13 : f32 to vector<64x384xf32>
    %29 = arith.cmpf oge, %27, %28 : vector<64x384xf32>
    %cst_14 = arith.constant 0.00999999977 : f32
    %30 = vector.broadcast %cst_14 : f32 to vector<64x384xf32>
    %31 = arith.mulf %30, %27 : vector<64x384xf32>
    %32 = arith.select %29, %27, %31 : vector<64x384xi1>, vector<64x384xf32>
    %c0_15 = arith.constant 0 : index
    %c0_16 = arith.constant 0 : index
    %33 = vector.load %arg6[%c0_15, %c0_16] : memref<64x384xf32, #tpu.memory_space<vmem>>, vector<64x384xf32>
    tpu.vector_store %arg6[%c0_15, %c0_16], %32 {strides = array<i32>} : memref<64x384xf32, #tpu.memory_space<vmem>>, vector<64x384xf32>,
    return
  }
  func.func @transform_0(%arg0: i32, %arg1: i32) -> (i32, i32) {
    %c0_i32 = arith.constant 0 : i32
    %c0_i32_0 = arith.constant 0 : i32
    return %c0_i32, %arg1 : i32, i32
  }
  func.func @transform_1(%arg0: i32, %arg1: i32) -> (i32, i32) {
    %c0_i32 = arith.constant 0 : i32
    return %arg1, %arg0 : i32, i32
  }
  func.func @transform_2(%arg0: i32, %arg1: i32) -> (i32, i32) {
    %c0_i32 = arith.constant 0 : i32
    %c0_i32_0 = arith.constant 0 : i32
    return %c0_i32, %arg0 : i32, i32
  }
  func.func @transform_3(%arg0: i32, %arg1: i32) -> (i32, i32) {
    %c0_i32 = arith.constant 0 : i32
    %c0_i32_0 = arith.constant 0 : i32
    return %c0_i32, %arg0 : i32, i32
  }
  func.func @transform_4(%arg0: i32, %arg1: i32) -> (i32, i32) {
    %c0_i32 = arith.constant 0 : i32
    %c0_i32_0 = arith.constant 0 : i32
    return %c0_i32, %arg0 : i32, i32
  }
}

</mosaic_0001>

<llo_original>
// kernel: tpu_custom_call.1
$region0: #{tpu_custom_call.1}
  #allocation0 [shape = 'u32[]', space=smem, size = 0x4, offset = 0x4, fixed_abs, tag = 'smem constant byte address 0x4 - core index']
  #allocation1 [shape = 'u32[144,128]{1,0:T(1,128)}', space=vmem, size = 0x12000, scoped, tag = 'internal scratch']
  %s0 = inlined_call_operand.hbm [shape: f32[64,128], index: 0, kind: input, shape index: {}]
  %s1 = inlined_call_operand.hbm [shape: f32[128,384], index: 1, kind: input, shape index: {}]
  %s2 = inlined_call_operand.vmem [shape: f32[1,384], index: 2, kind: input, shape index: {}]
  %s3 = inlined_call_operand.vmem [shape: f32[1,384], index: 3, kind: input, shape index: {}]
  %s4 = inlined_call_operand.hbm [shape: f32[64,384], index: 4, kind: output, shape index: {}]
  %s5 = sld [smem:[#allocation0]]
  $region34: #{tpu_custom_call.1} parent=0
    _
  %s7 = ssub.s32 1, %s5
  %s8 = scalar_select 0, %s7, %s5
  $region1: #{tpu_custom_call.1} parent=0
    #allocation2 [shape = 'u8[32768]{0}', space=vmem, size = 0x8000, scoped, tag = 'input window, operand 0, single buffered']
    #allocation3 [shape = 's32[1]{0}', space=sflag, size = 0x4, scoped, tag = 'scoped memory for tpu_custom_call.1']
    #allocation4 [shape = 's32[1]{0}', space=sflag, size = 0x4, scoped, tag = 'scoped memory for tpu_custom_call.1']
    #allocation5 [shape = 'u8[196608]{0}', space=vmem, size = 0x30000, scoped, tag = 'input window, operand 1, single buffered']
    #allocation6 [shape = 's32[1]{0}', space=sflag, size = 0x4, scoped, tag = 'scoped memory for tpu_custom_call.1']
    #allocation7 [shape = 'u8[98304]{0}', space=vmem, size = 0x18000, scoped, tag = 'output window, operand 0, single buffered']
    %9 = vsyncpa [#allocation3], 0
    %10 = vsyncpa [#allocation6], 0
    %11 = vsyncpa [#allocation4], 0
    // Predicated region
    $region2: #{tpu_custom_call.1} parent=1 // pred_check
      _
    $region3: #{tpu_custom_call.1} parent=1 // pred_check_branch
      %13 = sbr.rel (0) target = $region5
    $region4: #{tpu_custom_call.1} parent=1 // pred_region
      %s15 = ssub.s32 1024, 1024
      %16 = vsyncadd [#allocation3], %s15
      %s17 = sshll.u32 [#allocation2], 4
      %s18 = int_to_ptr.vmem [resolvable:$true] %s17
      %23 = dma.hbm_to_vmem [thread:$0]  %s0, 1024, %s18, [#allocation3], 128, 128, 8
    $region5: #{tpu_custom_call.1} parent=1 // pred_fallthru
      _
    // Predicated region
    $region6: #{tpu_custom_call.1} parent=1 // pred_check
      _
    $region7: #{tpu_custom_call.1} parent=1 // pred_check_branch
      %25 = sbr.rel (0) target = $region9
    $region8: #{tpu_custom_call.1} parent=1 // pred_region
      %s27 = ssub.s32 6144, 6144
      %28 = vsyncadd [#allocation6], %s27
      %s29 = sshll.u32 [#allocation5], 4
      %s30 = int_to_ptr.vmem [resolvable:$true] %s29
      %35 = dma.hbm_to_vmem [thread:$0]  %s1, 6144, %s30, [#allocation6], 384, 384, 24
    $region9: #{tpu_custom_call.1} parent=1 // pred_fallthru
      _
    // Predicated region
    $region10: #{tpu_custom_call.1} parent=1 // pred_check
      _
    $region11: #{tpu_custom_call.1} parent=1 // pred_check_branch
      %37 = sbr.rel (0) target = $region13
    $region12: #{tpu_custom_call.1} parent=1 // pred_region
      _
    $region13: #{tpu_custom_call.1} parent=1 // pred_fallthru
      _
    // Predicated region
    $region14: #{tpu_custom_call.1} parent=1 // pred_check
      _
    $region15: #{tpu_custom_call.1} parent=1 // pred_check_branch
      %39 = sbr.rel (0) target = $region17
    $region16: #{tpu_custom_call.1} parent=1 // pred_region
      _
    $region17: #{tpu_custom_call.1} parent=1 // pred_fallthru
      _
    // Predicated region
    $region18: #{tpu_custom_call.1} parent=1 // pred_check
      _
    $region19: #{tpu_custom_call.1} parent=1 // pred_check_branch
      %41 = sbr.rel (0) target = $region21
    $region20: #{tpu_custom_call.1} parent=1 // pred_region
      %42 = dma.done [#allocation3], 1024
    $region21: #{tpu_custom_call.1} parent=1 // pred_fallthru
      _
    // Predicated region
    $region22: #{tpu_custom_call.1} parent=1 // pred_check
      _
    $region23: #{tpu_custom_call.1} parent=1 // pred_check_branch
      %44 = sbr.rel (0) target = $region25
    $region24: #{tpu_custom_call.1} parent=1 // pred_region
      %45 = dma.done [#allocation6], 6144
    $region25: #{tpu_custom_call.1} parent=1 // pred_fallthru
      _
    %v46 = vld [vmem:[#allocation2] sm:$0xff]
    %v47 = vld [vmem:[#allocation2 + $0x8] sm:$0xff]
    %v48 = vld [vmem:[#allocation2 + $0x10] sm:$0xff]
    %v49 = vld [vmem:[#allocation2 + $0x18] sm:$0xff]
    %v50 = vld [vmem:[#allocation2 + $0x20] sm:$0xff]
    %v51 = vld [vmem:[#allocation2 + $0x28] sm:$0xff]
    %v52 = vld [vmem:[#allocation2 + $0x30] sm:$0xff]
    %v53 = vld [vmem:[#allocation2 + $0x38] sm:$0xff]
    %v54 = vld [vmem:[#allocation5] sm:$0xff]
    %v55 = vld [vmem:[#allocation5 + $0x8] sm:$0xff]
    %v56 = vld [vmem:[#allocation5 + $0x10] sm:$0xff]
    %v57 = vld [vmem:[#allocation5 + $0x18] sm:$0xff]
    %v58 = vld [vmem:[#allocation5 + $0x20] sm:$0xff]
    %v59 = vld [vmem:[#allocation5 + $0x28] sm:$0xff]
    %v60 = vld [vmem:[#allocation5 + $0x30] sm:$0xff]
    %v61 = vld [vmem:[#allocation5 + $0x38] sm:$0xff]
    %v62 = vld [vmem:[#allocation5 + $0x40] sm:$0xff]
    %v63 = vld [vmem:[#allocation5 + $0x48] sm:$0xff]
    %v64 = vld [vmem:[#allocation5 + $0x50] sm:$0xff]
    %v65 = vld [vmem:[#allocation5 + $0x58] sm:$0xff]
    %v66 = vld [vmem:[#allocation5 + $0x60] sm:$0xff]
    %v67 = vld [vmem:[#allocation5 + $0x68] sm:$0xff]
    %v68 = vld [vmem:[#allocation5 + $0x70] sm:$0xff]
    %v69 = vld [vmem:[#allocation5 + $0x78] sm:$0xff]
    %v70 = vld [vmem:[#allocation5 + $0x80] sm:$0xff]
    %v71 = vld [vmem:[#allocation5 + $0x88] sm:$0xff]
    %v72 = vld [vmem:[#allocation5 + $0x90] sm:$0xff]
    %v73 = vld [vmem:[#allocation5 + $0x98] sm:$0xff]
    %v74 = vld [vmem:[#allocation5 + $0xa0] sm:$0xff]
    %v75 = vld [vmem:[#allocation5 + $0xa8] sm:$0xff]
    %v76 = vld [vmem:[#allocation5 + $0xb0] sm:$0xff]
    %v77 = vld [vmem:[#allocation5 + $0xb8] sm:$0xff]
    %v78 = vld [vmem:[#allocation5 + $0xc0] sm:$0xff]
    %v79 = vld [vmem:[#allocation5 + $0xc8] sm:$0xff]
    %v80 = vld [vmem:[#allocation5 + $0xd0] sm:$0xff]
    %v81 = vld [vmem:[#allocation5 + $0xd8] sm:$0xff]
    %v82 = vld [vmem:[#allocation5 + $0xe0] sm:$0xff]
    %v83 = vld [vmem:[#allocation5 + $0xe8] sm:$0xff]
    %v84 = vld [vmem:[#allocation5 + $0xf0] sm:$0xff]
    %v85 = vld [vmem:[#allocation5 + $0xf8] sm:$0xff]
    %v86 = vld [vmem:[#allocation5 + $0x100] sm:$0xff]
    %v87 = vld [vmem:[#allocation5 + $0x108] sm:$0xff]
    %v88 = vld [vmem:[#allocation5 + $0x110] sm:$0xff]
    %v89 = vld [vmem:[#allocation5 + $0x118] sm:$0xff]
    %v90 = vld [vmem:[#allocation5 + $0x120] sm:$0xff]
    %v91 = vld [vmem:[#allocation5 + $0x128] sm:$0xff]
    %v92 = vld [vmem:[#allocation5 + $0x130] sm:$0xff]
    %v93 = vld [vmem:[#allocation5 + $0x138] sm:$0xff]
    %v94 = vld [vmem:[#allocation5 + $0x140] sm:$0xff]
    %v95 = vld [vmem:[#allocation5 + $0x148] sm:$0xff]
    %v96 = vld [vmem:[#allocation5 + $0x150] sm:$0xff]
    %v97 = vld [vmem:[#allocation5 + $0x158] sm:$0xff]
    %v98 = vld [vmem:[#allocation5 + $0x160] sm:$0xff]
    %v99 = vld [vmem:[#allocation5 + $0x168] sm:$0xff]
    %v100 = vld [vmem:[#allocation5 + $0x170] sm:$0xff]
    %v101 = vld [vmem:[#allocation5 + $0x178] sm:$0xff]
    %102 = vmatprep.subr.mxu0 %v55
    %103 = vmatpush1.msra.mxu0 %v54
    %104 = vmatprep.subr.mxu0 %v58
    %105 = vmatpush1.msra.mxu0 %v57
    %106 = vmatprep.subr.mxu0 %v61
    %107 = vmatpush1.msra.mxu0 %v60
    %108 = vmatprep.subr.mxu0 %v64
    %109 = vmatpush1.msra.mxu0 %v63
    %110 = vmatprep.subr.mxu0 %v67
    %111 = vmatpush1.msra.mxu0 %v66
    %112 = vmatprep.subr.mxu0 %v70
    %113 = vmatpush1.msra.mxu0 %v69
    %114 = vmatprep.subr.mxu0 %v73
    %115 = vmatpush1.msra.mxu0 %v72
    %116 = vmatprep.subr.mxu0 %v76
    %117 = vmatpush1.msra.mxu0 %v75
    %118 = vmatprep.subr.mxu0 %v79
    %119 = vmatpush1.msra.mxu0 %v78
    %120 = vmatprep.subr.mxu0 %v82
    %121 = vmatpush1.msra.mxu0 %v81
    %122 = vmatprep.subr.mxu0 %v85
    %123 = vmatpush1.msra.mxu0 %v84
    %124 = vmatprep.subr.mxu0 %v88
    %125 = vmatpush1.msra.mxu0 %v87
    %126 = vmatprep.subr.mxu0 %v91
    %127 = vmatpush1.msra.mxu0 %v90
    %128 = vmatprep.subr.mxu0 %v94
    %129 = vmatpush1.msra.mxu0 %v93
    %130 = vmatprep.subr.mxu0 %v97
    %131 = vmatpush1.msra.mxu0 %v96
    %132 = vmatprep.subr.mxu0 %v100
    %133 = vmatpush1.msra.mxu0 %v99
    %134 = vmatprep.subr.mxu0 0.0
    %135 = vmatpush1.msra.mxu0 0.0
    %136 = vmatprep.subr.mxu0 0.0
    %137 = vmatpush1.msra.mxu0 0.0
    %138 = vmatprep.subr.mxu0 0.0
    %139 = vmatpush1.msra.mxu0 0.0
    %140 = vmatprep.subr.mxu0 0.0
    %141 = vmatpush1.msra.mxu0 0.0
    %142 = vmatprep.subr.mxu0 0.0
    %143 = vmatpush1.msra.mxu0 0.0
    %144 = vmatprep.subr.mxu0 0.0
    %145 = vmatpush1.msra.mxu0 0.0
    %146 = vmatprep.subr.mxu0 0.0
    %147 = vmatpush1.msra.mxu0 0.0
    %148 = vmatprep.subr.mxu0 0.0
    %149 = vmatpush1.msra.mxu0 0.0
    %150 = vmatprep.subr.mxu0 0.0
    %151 = vmatpush1.msra.mxu0 0.0
    %152 = vmatprep.subr.mxu0 0.0
    %153 = vmatpush1.msra.mxu0 0.0
    %154 = vmatprep.subr.mxu0 0.0
    %155 = vmatpush1.msra.mxu0 0.0
    %156 = vmatprep.subr.mxu0 0.0
    %157 = vmatpush1.msra.mxu0 0.0
    %158 = vmatprep.subr.mxu0 0.0
    %159 = vmatpush1.msra.mxu0 0.0
    %160 = vmatprep.subr.mxu0 0.0
    %161 = vmatpush1.msra.mxu0 0.0
    %162 = vmatprep.subr.mxu0 0.0
    %163 = vmatpush1.msra.mxu0 0.0
    %164 = vmatprep.subr.mxu0 0.0
    %165 = vmatpush1.msra.mxu0 0.0
    %166 = vmatprep.mubr.f32.mxu0 0.0
    %167 = vmatmul.mubr.f32.gmra.mrb[0].mxu0 %v46
    %v168 = vpop.f32.mrb[0].mxu0
    %v169 = vadd.f32 0.0, %v168
    %v170 = vpop.f32.mrb[0].mxu0
    %v171 = vadd.f32 0.0, %v170
    %172 = vmatprep.mubr.f32.mxu0 0.0
    %173 = vmatmul.mubr.f32.gmra.mrb[0].mxu0 %v47
    %v174 = vpop.f32.mrb[0].mxu0
    %v175 = vadd.f32 0.0, %v174
    %v176 = vpop.f32.mrb[0].mxu0
    %v177 = vadd.f32 0.0, %v176
    %178 = vmatprep.mubr.f32.mxu0 0.0
    %179 = vmatmul.mubr.f32.gmra.mrb[0].mxu0 %v48
    %v180 = vpop.f32.mrb[0].mxu0
    %v181 = vadd.f32 0.0, %v180
    %v182 = vpop.f32.mrb[0].mxu0
    %v183 = vadd.f32 0.0, %v182
    %184 = vmatprep.mubr.f32.mxu0 0.0
    %185 = vmatmul.mubr.f32.gmra.mrb[0].mxu0 %v49
    %v186 = vpop.f32.mrb[0].mxu0
    %v187 = vadd.f32 0.0, %v186
    %v188 = vpop.f32.mrb[0].mxu0
    %v189 = vadd.f32 0.0, %v188
    %190 = vmatprep.mubr.f32.mxu0 0.0
    %191 = vmatmul.mubr.f32.gmra.mrb[0].mxu0 %v50
    %v192 = vpop.f32.mrb[0].mxu0
    %v193 = vadd.f32 0.0, %v192
    %v194 = vpop.f32.mrb[0].mxu0
    %v195 = vadd.f32 0.0, %v194
    %196 = vmatprep.mubr.f32.mxu0 0.0
    %197 = vmatmul.mubr.f32.gmra.mrb[0].mxu0 %v51
    %v198 = vpop.f32.mrb[0].mxu0
    %v199 = vadd.f32 0.0, %v198
    %v200 = vpop.f32.mrb[0].mxu0
    %v201 = vadd.f32 0.0, %v200
    %202 = vmatprep.mubr.f32.mxu0 0.0
    %203 = vmatmul.mubr.f32.gmra.mrb[0].mxu0 %v52
    %v204 = vpop.f32.mrb[0].mxu0
    %v205 = vadd.f32 0.0, %v204
    %v206 = vpop.f32.mrb[0].mxu0
    %v207 = vadd.f32 0.0, %v206
    %208 = vmatprep.mubr.f32.mxu0 0.0
    %209 = vmatmul.mubr.f32.gmra.mrb[0].mxu0 %v53
    %v210 = vpop.f32.mrb[0].mxu0
    %v211 = vadd.f32 0.0, %v210
    %v212 = vpop.f32.mrb[0].mxu0
    %v213 = vadd.f32 0.0, %v212
    %214 = vdwg.mxu0
    %215 = vmatprep.subr.mxu0 0.0
    %216 = vmatpush1.msra.mxu0 %v56
    %217 = vmatprep.subr.mxu0 0.0
    %218 = vmatpush1.msra.mxu0 %v59
    %219 = vmatprep.subr.mxu0 0.0
    %220 = vmatpush1.msra.mxu0 %v62
    %221 = vmatprep.subr.mxu0 0.0
    %222 = vmatpush1.msra.mxu0 %v65
    %223 = vmatprep.subr.mxu0 0.0
    %224 = vmatpush1.msra.mxu0 %v68
    %225 = vmatprep.subr.mxu0 0.0
    %226 = vmatpush1.msra.mxu0 %v71
    %227 = vmatprep.subr.mxu0 0.0
    %228 = vmatpush1.msra.mxu0 %v74
    %229 = vmatprep.subr.mxu0 0.0
    %230 = vmatpush1.msra.mxu0 %v77
    %231 = vmatprep.subr.mxu0 0.0
    %232 = vmatpush1.msra.mxu0 %v80
    %233 = vmatprep.subr.mxu0 0.0
    %234 = vmatpush1.msra.mxu0 %v83
    %235 = vmatprep.subr.mxu0 0.0
    %236 = vmatpush1.msra.mxu0 %v86
    %237 = vmatprep.subr.mxu0 0.0
    %238 = vmatpush1.msra.mxu0 %v89
    %239 = vmatprep.subr.mxu0 0.0
    %240 = vmatpush1.msra.mxu0 %v92
    %241 = vmatprep.subr.mxu0 0.0
    %242 = vmatpush1.msra.mxu0 %v95
    %243 = vmatprep.subr.mxu0 0.0
    %244 = vmatpush1.msra.mxu0 %v98
    %245 = vmatprep.subr.mxu0 0.0
    %246 = vmatpush1.msra.mxu0 %v101
    %247 = vmatprep.subr.mxu0 0.0
    %248 = vmatpush1.msra.mxu0 0.0
    %249 = vmatprep.subr.mxu0 0.0
    %250 = vmatpush1.msra.mxu0 0.0
    %251 = vmatprep.subr.mxu0 0.0
    %252 = vmatpush1.msra.mxu0 0.0
    %253 = vmatprep.subr.mxu0 0.0
    %254 = vmatpush1.msra.mxu0 0.0
    %255 = vmatprep.subr.mxu0 0.0
    %256 = vmatpush1.msra.mxu0 0.0
    %257 = vmatprep.subr.mxu0 0.0
    %258 = vmatpush1.msra.mxu0 0.0
    %259 = vmatprep.subr.mxu0 0.0
    %260 = vmatpush1.msra.mxu0 0.0
    %261 = vmatprep.subr.mxu0 0.0
    %262 = vmatpush1.msra.mxu0 0.0
    %263 = vmatprep.subr.mxu0 0.0
    %264 = vmatpush1.msra.mxu0 0.0
    %265 = vmatprep.subr.mxu0 0.0
    %266 = vmatpush1.msra.mxu0 0.0
    %267 = vmatprep.subr.mxu0 0.0
    %268 = vmatpush1.msra.mxu0 0.0
    %269 = vmatprep.subr.mxu0 0.0
    %270 = vmatpush1.msra.mxu0 0.0
    %271 = vmatprep.subr.mxu0 0.0
    %272 = vmatpush1.msra.mxu0 0.0
    %273 = vmatprep.subr.mxu0 0.0
    %274 = vmatpush1.msra.mxu0 0.0
    %275 = vmatprep.subr.mxu0 0.0
    %276 = vmatpush1.msra.mxu0 0.0
    %277 = vmatprep.subr.mxu0 0.0
    %278 = vmatpush1.msra.mxu0 0.0
    %279 = vmatprep.mubr.f32.mxu0 0.0
    %280 = vmatmul.mubr.f32.gmra.mrb[0].mxu0 %v46
    %v281 = vpop.f32.mrb[0].mxu0
    %v282 = vadd.f32 0.0, %v281
    %v283 = vpop.f32.mrb[0].mxu0
    %284 = vmatprep.mubr.f32.mxu0 0.0
    %285 = vmatmul.mubr.f32.gmra.mrb[0].mxu0 %v47
    %v286 = vpop.f32.mrb[0].mxu0
    %v287 = vadd.f32 0.0, %v286
    %v288 = vpop.f32.mrb[0].mxu0
    %289 = vmatprep.mubr.f32.mxu0 0.0
    %290 = vmatmul.mubr.f32.gmra.mrb[0].mxu0 %v48
    %v291 = vpop.f32.mrb[0].mxu0
    %v292 = vadd.f32 0.0, %v291
    %v293 = vpop.f32.mrb[0].mxu0
    %294 = vmatprep.mubr.f32.mxu0 0.0
    %295 = vmatmul.mubr.f32.gmra.mrb[0].mxu0 %v49
    %v296 = vpop.f32.mrb[0].mxu0
    %v297 = vadd.f32 0.0, %v296
    %v298 = vpop.f32.mrb[0].mxu0
    %299 = vmatprep.mubr.f32.mxu0 0.0
    %300 = vmatmul.mubr.f32.gmra.mrb[0].mxu0 %v50
    %v301 = vpop.f32.mrb[0].mxu0
    %v302 = vadd.f32 0.0, %v301
    %v303 = vpop.f32.mrb[0].mxu0
    %304 = vmatprep.mubr.f32.mxu0 0.0
    %305 = vmatmul.mubr.f32.gmra.mrb[0].mxu0 %v51
    %v306 = vpop.f32.mrb[0].mxu0
    %v307 = vadd.f32 0.0, %v306
    %v308 = vpop.f32.mrb[0].mxu0
    %309 = vmatprep.mubr.f32.mxu0 0.0
    %310 = vmatmul.mubr.f32.gmra.mrb[0].mxu0 %v52
    %v311 = vpop.f32.mrb[0].mxu0
    %v312 = vadd.f32 0.0, %v311
    %v313 = vpop.f32.mrb[0].mxu0
    %314 = vmatprep.mubr.f32.mxu0 0.0
    %315 = vmatmul.mubr.f32.gmra.mrb[0].mxu0 %v53
    %v316 = vpop.f32.mrb[0].mxu0
    %v317 = vadd.f32 0.0, %v316
    %v318 = vpop.f32.mrb[0].mxu0
    %319 = vdwg.mxu0
    %v320 = vld [vmem:[%s2] sm:$0x7]
    %v321 = vld [vmem:[%s3] sm:$0x7]
    %v322 = vadd.f32 %v169, %v175
    %v323 = vadd.f32 %v322, %v181
    %v324 = vadd.f32 %v323, %v187
    %v325 = vadd.f32 %v324, %v193
    %v326 = vadd.f32 %v325, %v199
    %v327 = vadd.f32 %v326, %v205
    %v328 = vadd.f32 %v327, %v211
    %v329 = vrot.slane %v328, 4
    %v330 = vadd.f32 %v328, %v329
    %v331 = vrot.slane %v330, 2
    %v332 = vadd.f32 %v330, %v331
    %v333 = vrot.slane %v332, 1
    %v334 = vadd.f32 %v332, %v333
    %v335 = vadd.f32 %v171, %v177
    %v336 = vadd.f32 %v335, %v183
    %v337 = vadd.f32 %v336, %v189
    %v338 = vadd.f32 %v337, %v195
    %v339 = vadd.f32 %v338, %v201
    %v340 = vadd.f32 %v339, %v207
    %v341 = vadd.f32 %v340, %v213
    %v342 = vrot.slane %v341, 4
    %v343 = vadd.f32 %v341, %v342
    %v344 = vrot.slane %v343, 2
    %v345 = vadd.f32 %v343, %v344
    %v346 = vrot.slane %v345, 1
    %v347 = vadd.f32 %v345, %v346
    %v348 = vadd.f32 %v282, %v287
    %v349 = vadd.f32 %v348, %v292
    %v350 = vadd.f32 %v349, %v297
    %v351 = vadd.f32 %v350, %v302
    %v352 = vadd.f32 %v351, %v307
    %v353 = vadd.f32 %v352, %v312
    %v354 = vadd.f32 %v353, %v317
    %v355 = vrot.slane %v354, 4
    %v356 = vadd.f32 %v354, %v355
    %v357 = vrot.slane %v356, 2
    %v358 = vadd.f32 %v356, %v357
    %v359 = vrot.slane %v358, 1
    %v360 = vadd.f32 %v358, %v359
    %v361 = vmul.f32 %v334, 0.015625
    %v362 = vmul.f32 %v347, 0.015625
    %v363 = vmul.f32 %v360, 0.015625
    %v364 = vmul.f32 %v169, %v169
    %v365 = vmul.f32 %v171, %v171
    %v366 = vmul.f32 %v282, %v282
    %v367 = vmul.f32 %v175, %v175
    %v368 = vmul.f32 %v177, %v177
    %v369 = vmul.f32 %v287, %v287
    %v370 = vmul.f32 %v181, %v181
    %v371 = vmul.f32 %v183, %v183
    %v372 = vmul.f32 %v292, %v292
    %v373 = vmul.f32 %v187, %v187
    %v374 = vmul.f32 %v189, %v189
    %v375 = vmul.f32 %v297, %v297
    %v376 = vmul.f32 %v193, %v193
    %v377 = vmul.f32 %v195, %v195
    %v378 = vmul.f32 %v302, %v302
    %v379 = vmul.f32 %v199, %v199
    %v380 = vmul.f32 %v201, %v201
    %v381 = vmul.f32 %v307, %v307
    %v382 = vmul.f32 %v205, %v205
    %v383 = vmul.f32 %v207, %v207
    %v384 = vmul.f32 %v312, %v312
    %v385 = vmul.f32 %v211, %v211
    %v386 = vmul.f32 %v213, %v213
    %v387 = vmul.f32 %v317, %v317
    %v388 = vadd.f32 %v364, %v367
    %v389 = vadd.f32 %v388, %v370
    %v390 = vadd.f32 %v389, %v373
    %v391 = vadd.f32 %v390, %v376
    %v392 = vadd.f32 %v391, %v379
    %v393 = vadd.f32 %v392, %v382
    %v394 = vadd.f32 %v393, %v385
    %v395 = vrot.slane %v394, 4
    %v396 = vadd.f32 %v394, %v395
    %v397 = vrot.slane %v396, 2
    %v398 = vadd.f32 %v396, %v397
    %v399 = vrot.slane %v398, 1
    %v400 = vadd.f32 %v398, %v399
    %v401 = vadd.f32 %v365, %v368
    %v402 = vadd.f32 %v401, %v371
    %v403 = vadd.f32 %v402, %v374
    %v404 = vadd.f32 %v403, %v377
    %v405 = vadd.f32 %v404, %v380
    %v406 = vadd.f32 %v405, %v383
    %v407 = vadd.f32 %v406, %v386
    %v408 = vrot.slane %v407, 4
    %v409 = vadd.f32 %v407, %v408
    %v410 = vrot.slane %v409, 2
    %v411 = vadd.f32 %v409, %v410
    %v412 = vrot.slane %v411, 1
    %v413 = vadd.f32 %v411, %v412
    %v414 = vadd.f32 %v366, %v369
    %v415 = vadd.f32 %v414, %v372
    %v416 = vadd.f32 %v415, %v375
    %v417 = vadd.f32 %v416, %v378
    %v418 = vadd.f32 %v417, %v381
    %v419 = vadd.f32 %v418, %v384
    %v420 = vadd.f32 %v419, %v387
    %v421 = vrot.slane %v420, 4
    %v422 = vadd.f32 %v420, %v421
    %v423 = vrot.slane %v422, 2
    %v424 = vadd.f32 %v422, %v423
    %v425 = vrot.slane %v424, 1
    %v426 = vadd.f32 %v424, %v425
    %v427 = vmul.f32 %v400, 0.015625
    %v428 = vmul.f32 %v413, 0.015625
    %v429 = vmul.f32 %v426, 0.015625
    %v430 = vmul.f32 %v361, %v361
    %v431 = vmul.f32 %v362, %v362
    %v432 = vmul.f32 %v363, %v363
    %v433 = vsub.f32 %v427, %v430
    %v434 = vsub.f32 %v428, %v431
    %v435 = vsub.f32 %v429, %v432
    %v436 = vmax.f32 %v433, 0.0
    %v437 = vmax.f32 %v434, 0.0
    %v438 = vmax.f32 %v435, 0.0
    %v439 = vadd.f32 %v436, 1e-05
    %v440 = vadd.f32 %v437, 1e-05
    %v441 = vadd.f32 %v438, 1e-05
    %v442 = vrsqrt.pop %v439
    %v443 = vrsqrt.pop %v440
    %v444 = vrsqrt.pop %v441
    %v448 = vcombine.low %v442, %v443
    %v450 = vunpack.c.l.s4 1966171168
    %v451 = vunpack.c.0.s8 %v450
    %v452 = vlaneseq
    %v453 = vshrl.u32 %v452, 7
    %v454 = vsub.s32 %v451, %v453
    %v455 = vrot.slane %v448, %v454
    %v457 = vunpack.c.l.s4 1966171168
    %v458 = vunpack.c.0.s8 %v457
    %v459 = vlaneseq
    %v460 = vshrl.u32 %v459, 7
    %v461 = vsub.s32 %v458, %v460
    %v462 = vrot.slane %v444, %v461
    %v463 = vcombine.low %v455, %v462
    %v465 = vunpack.c.l.s4 1966171168
    %v466 = vunpack.c.0.s8 %v465
    %v467 = vlaneseq
    %v468 = vshrl.u32 %v467, 7
    %v469 = vsub.s32 %v466, %v468
    %v470 = vrot.slane %v463, %v469
    %v472 = vmul.f32 %v320, %v470
    %v474 = vlaneseq
    %v475 = vshrl.u32 %v474, 7
    %v476 = vsub.s32 0, %v475
    %v477 = vrot.slane %v472, %v476
    %v478 = vlaneseq
    %v479 = vshrl.u32 %v478, 7
    %v480 = vsub.s32 1, %v479
    %v481 = vrot.slane %v472, %v480
    %v482 = vlaneseq
    %v483 = vshrl.u32 %v482, 7
    %v484 = vsub.s32 2, %v483
    %v485 = vrot.slane %v472, %v484
    %v489 = vmul.f32 %v361, %v477
    %v490 = vmul.f32 %v362, %v481
    %v491 = vmul.f32 %v363, %v485
    %v495 = vcombine.low %v489, %v490
    %v497 = vunpack.c.l.s4 1966171168
    %v498 = vunpack.c.0.s8 %v497
    %v499 = vlaneseq
    %v500 = vshrl.u32 %v499, 7
    %v501 = vsub.s32 %v498, %v500
    %v502 = vrot.slane %v495, %v501
    %v504 = vunpack.c.l.s4 1966171168
    %v505 = vunpack.c.0.s8 %v504
    %v506 = vlaneseq
    %v507 = vshrl.u32 %v506, 7
    %v508 = vsub.s32 %v505, %v507
    %v509 = vrot.slane %v491, %v508
    %v510 = vcombine.low %v502, %v509
    %v512 = vunpack.c.l.s4 1966171168
    %v513 = vunpack.c.0.s8 %v512
    %v514 = vlaneseq
    %v515 = vshrl.u32 %v514, 7
    %v516 = vsub.s32 %v513, %v515
    %v517 = vrot.slane %v510, %v516
    %v519 = vsub.f32 %v321, %v517
    %v520 = vmul.f32 %v169, %v477
    %v521 = vmul.f32 %v171, %v481
    %v522 = vmul.f32 %v282, %v485
    %v523 = vmul.f32 %v175, %v477
    %v524 = vmul.f32 %v177, %v481
    %v525 = vmul.f32 %v287, %v485
    %v526 = vmul.f32 %v181, %v477
    %v527 = vmul.f32 %v183, %v481
    %v528 = vmul.f32 %v292, %v485
    %v529 = vmul.f32 %v187, %v477
    %v530 = vmul.f32 %v189, %v481
    %v531 = vmul.f32 %v297, %v485
    %v532 = vmul.f32 %v193, %v477
    %v533 = vmul.f32 %v195, %v481
    %v534 = vmul.f32 %v302, %v485
    %v535 = vmul.f32 %v199, %v477
    %v536 = vmul.f32 %v201, %v481
    %v537 = vmul.f32 %v307, %v485
    %v538 = vmul.f32 %v205, %v477
    %v539 = vmul.f32 %v207, %v481
    %v540 = vmul.f32 %v312, %v485
    %v541 = vmul.f32 %v211, %v477
    %v542 = vmul.f32 %v213, %v481
    %v543 = vmul.f32 %v317, %v485
    %v545 = vlaneseq
    %v546 = vshrl.u32 %v545, 7
    %v547 = vsub.s32 0, %v546
    %v548 = vrot.slane %v519, %v547
    %v549 = vlaneseq
    %v550 = vshrl.u32 %v549, 7
    %v551 = vsub.s32 1, %v550
    %v552 = vrot.slane %v519, %v551
    %v553 = vlaneseq
    %v554 = vshrl.u32 %v553, 7
    %v555 = vsub.s32 2, %v554
    %v556 = vrot.slane %v519, %v555
    %v560 = vadd.f32 %v520, %v548
    %v561 = vadd.f32 %v521, %v552
    %v562 = vadd.f32 %v522, %v556
    %v563 = vadd.f32 %v523, %v548
    %v564 = vadd.f32 %v524, %v552
    %v565 = vadd.f32 %v525, %v556
    %v566 = vadd.f32 %v526, %v548
    %v567 = vadd.f32 %v527, %v552
    %v568 = vadd.f32 %v528, %v556
    %v569 = vadd.f32 %v529, %v548
    %v570 = vadd.f32 %v530, %v552
    %v571 = vadd.f32 %v531, %v556
    %v572 = vadd.f32 %v532, %v548
    %v573 = vadd.f32 %v533, %v552
    %v574 = vadd.f32 %v534, %v556
    %v575 = vadd.f32 %v535, %v548
    %v576 = vadd.f32 %v536, %v552
    %v577 = vadd.f32 %v537, %v556
    %v578 = vadd.f32 %v538, %v548
    %v579 = vadd.f32 %v539, %v552
    %v580 = vadd.f32 %v540, %v556
    %v581 = vadd.f32 %v541, %v548
    %v582 = vadd.f32 %v542, %v552
    %v583 = vadd.f32 %v543, %v556
    %vm584 = vcmp.ge.f32.partialorder %v560, 0.0
    %vm585 = vcmp.ge.f32.partialorder %v561, 0.0
    %vm586 = vcmp.ge.f32.partialorder %v562, 0.0
    %vm587 = vcmp.ge.f32.partialorder %v563, 0.0
    %vm588 = vcmp.ge.f32.partialorder %v564, 0.0
    %vm589 = vcmp.ge.f32.partialorder %v565, 0.0
    %vm590 = vcmp.ge.f32.partialorder %v566, 0.0
    %vm591 = vcmp.ge.f32.partialorder %v567, 0.0
    %vm592 = vcmp.ge.f32.partialorder %v568, 0.0
    %vm593 = vcmp.ge.f32.partialorder %v569, 0.0
    %vm594 = vcmp.ge.f32.partialorder %v570, 0.0
    %vm595 = vcmp.ge.f32.partialorder %v571, 0.0
    %vm596 = vcmp.ge.f32.partialorder %v572, 0.0
    %vm597 = vcmp.ge.f32.partialorder %v573, 0.0
    %vm598 = vcmp.ge.f32.partialorder %v574, 0.0
    %vm599 = vcmp.ge.f32.partialorder %v575, 0.0
    %vm600 = vcmp.ge.f32.partialorder %v576, 0.0
    %vm601 = vcmp.ge.f32.partialorder %v577, 0.0
    %vm602 = vcmp.ge.f32.partialorder %v578, 0.0
    %vm603 = vcmp.ge.f32.partialorder %v579, 0.0
    %vm604 = vcmp.ge.f32.partialorder %v580, 0.0
    %vm605 = vcmp.ge.f32.partialorder %v581, 0.0
    %vm606 = vcmp.ge.f32.partialorder %v582, 0.0
    %vm607 = vcmp.ge.f32.partialorder %v583, 0.0
    %v608 = vmul.f32 %v560, 0.01
    %v609 = vmul.f32 %v561, 0.01
    %v610 = vmul.f32 %v562, 0.01
    %v611 = vmul.f32 %v563, 0.01
    %v612 = vmul.f32 %v564, 0.01
    %v613 = vmul.f32 %v565, 0.01
    %v614 = vmul.f32 %v566, 0.01
    %v615 = vmul.f32 %v567, 0.01
    %v616 = vmul.f32 %v568, 0.01
    %v617 = vmul.f32 %v569, 0.01
    %v618 = vmul.f32 %v570, 0.01
    %v619 = vmul.f32 %v571, 0.01
    %v620 = vmul.f32 %v572, 0.01
    %v621 = vmul.f32 %v573, 0.01
    %v622 = vmul.f32 %v574, 0.01
    %v623 = vmul.f32 %v575, 0.01
    %v624 = vmul.f32 %v576, 0.01
    %v625 = vmul.f32 %v577, 0.01
    %v626 = vmul.f32 %v578, 0.01
    %v627 = vmul.f32 %v579, 0.01
    %v628 = vmul.f32 %v580, 0.01
    %v629 = vmul.f32 %v581, 0.01
    %v630 = vmul.f32 %v582, 0.01
    %v631 = vmul.f32 %v583, 0.01
    %v632 = vsel %vm584, %v560, %v608
    %v633 = vsel %vm585, %v561, %v609
    %v634 = vsel %vm586, %v562, %v610
    %v635 = vsel %vm587, %v563, %v611
    %v636 = vsel %vm588, %v564, %v612
    %v637 = vsel %vm589, %v565, %v613
    %v638 = vsel %vm590, %v566, %v614
    %v639 = vsel %vm591, %v567, %v615
    %v640 = vsel %vm592, %v568, %v616
    %v641 = vsel %vm593, %v569, %v617
    %v642 = vsel %vm594, %v570, %v618
    %v643 = vsel %vm595, %v571, %v619
    %v644 = vsel %vm596, %v572, %v620
    %v645 = vsel %vm597, %v573, %v621
    %v646 = vsel %vm598, %v574, %v622
    %v647 = vsel %vm599, %v575, %v623
    %v648 = vsel %vm600, %v576, %v624
    %v649 = vsel %vm601, %v577, %v625
    %v650 = vsel %vm602, %v578, %v626
    %v651 = vsel %vm603, %v579, %v627
    %v652 = vsel %vm604, %v580, %v628
    %v653 = vsel %vm605, %v581, %v629
    %v654 = vsel %vm606, %v582, %v630
    %v655 = vsel %vm607, %v583, %v631
    %656 = vst [vmem:[#allocation7] sm:$0xff] %v632
    %657 = vst [vmem:[#allocation7 + $0x8] sm:$0xff] %v633
    %658 = vst [vmem:[#allocation7 + $0x10] sm:$0xff] %v634
    %659 = vst [vmem:[#allocation7 + $0x18] sm:$0xff] %v635
    %660 = vst [vmem:[#allocation7 + $0x20] sm:$0xff] %v636
    %661 = vst [vmem:[#allocation7 + $0x28] sm:$0xff] %v637
    %662 = vst [vmem:[#allocation7 + $0x30] sm:$0xff] %v638
    %663 = vst [vmem:[#allocation7 + $0x38] sm:$0xff] %v639
    %664 = vst [vmem:[#allocation7 + $0x40] sm:$0xff] %v640
    %665 = vst [vmem:[#allocation7 + $0x48] sm:$0xff] %v641
    %666 = vst [vmem:[#allocation7 + $0x50] sm:$0xff] %v642
    %667 = vst [vmem:[#allocation7 + $0x58] sm:$0xff] %v643
    %668 = vst [vmem:[#allocation7 + $0x60] sm:$0xff] %v644
    %669 = vst [vmem:[#allocation7 + $0x68] sm:$0xff] %v645
    %670 = vst [vmem:[#allocation7 + $0x70] sm:$0xff] %v646
    %671 = vst [vmem:[#allocation7 + $0x78] sm:$0xff] %v647
    %672 = vst [vmem:[#allocation7 + $0x80] sm:$0xff] %v648
    %673 = vst [vmem:[#allocation7 + $0x88] sm:$0xff] %v649
    %674 = vst [vmem:[#allocation7 + $0x90] sm:$0xff] %v650
    %675 = vst [vmem:[#allocation7 + $0x98] sm:$0xff] %v651
    %676 = vst [vmem:[#allocation7 + $0xa0] sm:$0xff] %v652
    %677 = vst [vmem:[#allocation7 + $0xa8] sm:$0xff] %v653
    %678 = vst [vmem:[#allocation7 + $0xb0] sm:$0xff] %v654
    %679 = vst [vmem:[#allocation7 + $0xb8] sm:$0xff] %v655
    // Predicated region
    $region26: #{tpu_custom_call.1} parent=1 // pred_check
      _
    $region27: #{tpu_custom_call.1} parent=1 // pred_check_branch
      %681 = sbr.rel (0) target = $region29
    $region28: #{tpu_custom_call.1} parent=1 // pred_region
      %s683 = ssub.s32 3072, 3072
      %684 = vsyncadd [#allocation4], %s683
      %s685 = sshll.u32 [#allocation7], 4
      %s686 = int_to_ptr.vmem [resolvable:$true] %s685
      %691 = dma.vmem_to_hbm [thread:$0]  %s686, 3072, %s4, [#allocation4], 384, 384, 24
    $region29: #{tpu_custom_call.1} parent=1 // pred_fallthru
      _
    // Predicated region
    $region30: #{tpu_custom_call.1} parent=1 // pred_check
      _
    $region31: #{tpu_custom_call.1} parent=1 // pred_check_branch
      %693 = sbr.rel (0) target = $region33
    $region32: #{tpu_custom_call.1} parent=1 // pred_region
      %694 = dma.done [#allocation4], 3072
    $region33: #{tpu_custom_call.1} parent=1 // pred_fallthru
      _
    %695 = vsyncpa [#allocation3], 1
    %696 = vsyncpa [#allocation6], 1
    %697 = vsyncpa [#allocation4], 1

// kernel: tpu_custom_call.1
$region0: #{tpu_custom_call.1}
  #allocation0 [shape = 'u32[]', space=smem, size = 0x4, offset = 0x4, fixed_abs, tag = 'smem constant byte address 0x4 - core index']
  #allocation1 [shape = 'u32[144,128]{1,0:T(1,128)}', space=vmem, size = 0x12000, scoped, tag = 'internal scratch']
  %s0 = inlined_call_operand.hbm [shape: f32[64,128], index: 0, kind: input, shape index: {}]
  %s1 = inlined_call_operand.hbm [shape: f32[128,384], index: 1, kind: input, shape index: {}]
  %s2 = inlined_call_operand.vmem [shape: f32[1,384], index: 2, kind: input, shape index: {}]
  %s3 = inlined_call_operand.vmem [shape: f32[1,384], index: 3, kind: input, shape index: {}]
  %s4 = inlined_call_operand.hbm [shape: f32[64,384], index: 4, kind: output, shape index: {}]
  %s5 = sld [smem:[#allocation0]]
  $region34: #{tpu_custom_call.1} parent=0
    _
  %s7 = ssub.s32 1, %s5
  %s8 = scalar_select 0, %s7, %s5
  $region1: #{tpu_custom_call.1} parent=0
    #allocation2 [shape = 'u8[32768]{0}', space=vmem, size = 0x8000, scoped, tag = 'input window, operand 0, single buffered']
    #allocation3 [shape = 's32[1]{0}', space=sflag, size = 0x4, scoped, tag = 'scoped memory for tpu_custom_call.1']
    #allocation4 [shape = 's32[1]{0}', space=sflag, size = 0x4, scoped, tag = 'scoped memory for tpu_custom_call.1']
    #allocation5 [shape = 'u8[196608]{0}', space=vmem, size = 0x30000, scoped, tag = 'input window, operand 1, single buffered']
    #allocation6 [shape = 's32[1]{0}', space=sflag, size = 0x4, scoped, tag = 'scoped memory for tpu_custom_call.1']
    #allocation7 [shape = 'u8[98304]{0}', space=vmem, size = 0x18000, scoped, tag = 'output window, operand 0, single buffered']
    %9 = vsyncpa [#allocation3], 0
    %10 = vsyncpa [#allocation6], 0
    %11 = vsyncpa [#allocation4], 0
    // Predicated region
    $region2: #{tpu_custom_call.1} parent=1 // pred_check
      _
    $region3: #{tpu_custom_call.1} parent=1 // pred_check_branch
      %13 = sbr.rel (0) target = $region5
    $region4: #{tpu_custom_call.1} parent=1 // pred_region
      %s15 = ssub.s32 1024, 1024
      %16 = vsyncadd [#allocation3], %s15
      %s17 = sshll.u32 [#allocation2], 4
      %s18 = int_to_ptr.vmem [resolvable:$true] %s17
      %23 = dma.hbm_to_vmem [thread:$0]  %s0, 1024, %s18, [#allocation3], 128, 128, 8
    $region5: #{tpu_custom_call.1} parent=1 // pred_fallthru
      _
    // Predicated region
    $region6: #{tpu_custom_call.1} parent=1 // pred_check
      _
    $region7: #{tpu_custom_call.1} parent=1 // pred_check_branch
      %25 = sbr.rel (0) target = $region9
    $region8: #{tpu_custom_call.1} parent=1 // pred_region
      %s27 = ssub.s32 6144, 6144
      %28 = vsyncadd [#allocation6], %s27
      %s29 = sshll.u32 [#allocation5], 4
      %s30 = int_to_ptr.vmem [resolvable:$true] %s29
      %35 = dma.hbm_to_vmem [thread:$0]  %s1, 6144, %s30, [#allocation6], 384, 384, 24
    $region9: #{tpu_custom_call.1} parent=1 // pred_fallthru
      _
    // Predicated region
    $region10: #{tpu_custom_call.1} parent=1 // pred_check
      _
    $region11: #{tpu_custom_call.1} parent=1 // pred_check_branch
      %37 = sbr.rel (0) target = $region13
    $region12: #{tpu_custom_call.1} parent=1 // pred_region
      _
    $region13: #{tpu_custom_call.1} parent=1 // pred_fallthru
      _
    // Predicated region
    $region14: #{tpu_custom_call.1} parent=1 // pred_check
      _
    $region15: #{tpu_custom_call.1} parent=1 // pred_check_branch
      %39 = sbr.rel (0) target = $region17
    $region16: #{tpu_custom_call.1} parent=1 // pred_region
      _
    $region17: #{tpu_custom_call.1} parent=1 // pred_fallthru
      _
    // Predicated region
    $region18: #{tpu_custom_call.1} parent=1 // pred_check
      _
    $region19: #{tpu_custom_call.1} parent=1 // pred_check_branch
      %41 = sbr.rel (0) target = $region21
    $region20: #{tpu_custom_call.1} parent=1 // pred_region
      %42 = dma.done [#allocation3], 1024
    $region21: #{tpu_custom_call.1} parent=1 // pred_fallthru
      _
    // Predicated region
    $region22: #{tpu_custom_call.1} parent=1 // pred_check
      _
    $region23: #{tpu_custom_call.1} parent=1 // pred_check_branch
      %44 = sbr.rel (0) target = $region25
    $region24: #{tpu_custom_call.1} parent=1 // pred_region
      %45 = dma.done [#allocation6], 6144
    $region25: #{tpu_custom_call.1} parent=1 // pred_fallthru
      _
    %v46 = vld [vmem:[#allocation2] sm:$0xff]
    %v47 = vld [vmem:[#allocation2 + $0x8] sm:$0xff]
    %v48 = vld [vmem:[#allocation2 + $0x10] sm:$0xff]
    %v49 = vld [vmem:[#allocation2 + $0x18] sm:$0xff]
    %v50 = vld [vmem:[#allocation2 + $0x20] sm:$0xff]
    %v51 = vld [vmem:[#allocation2 + $0x28] sm:$0xff]
    %v52 = vld [vmem:[#allocation2 + $0x30] sm:$0xff]
    %v53 = vld [vmem:[#allocation2 + $0x38] sm:$0xff]
    %v54 = vld [vmem:[#allocation5] sm:$0xff]
    %v55 = vld [vmem:[#allocation5 + $0x8] sm:$0xff]
    %v56 = vld [vmem:[#allocation5 + $0x10] sm:$0xff]
    %v57 = vld [vmem:[#allocation5 + $0x18] sm:$0xff]
    %v58 = vld [vmem:[#allocation5 + $0x20] sm:$0xff]
    %v59 = vld [vmem:[#allocation5 + $0x28] sm:$0xff]
    %v60 = vld [vmem:[#allocation5 + $0x30] sm:$0xff]
    %v61 = vld [vmem:[#allocation5 + $0x38] sm:$0xff]
    %v62 = vld [vmem:[#allocation5 + $0x40] sm:$0xff]
    %v63 = vld [vmem:[#allocation5 + $0x48] sm:$0xff]
    %v64 = vld [vmem:[#allocation5 + $0x50] sm:$0xff]
    %v65 = vld [vmem:[#allocation5 + $0x58] sm:$0xff]
    %v66 = vld [vmem:[#allocation5 + $0x60] sm:$0xff]
    %v67 = vld [vmem:[#allocation5 + $0x68] sm:$0xff]
    %v68 = vld [vmem:[#allocation5 + $0x70] sm:$0xff]
    %v69 = vld [vmem:[#allocation5 + $0x78] sm:$0xff]
    %v70 = vld [vmem:[#allocation5 + $0x80] sm:$0xff]
    %v71 = vld [vmem:[#allocation5 + $0x88] sm:$0xff]
    %v72 = vld [vmem:[#allocation5 + $0x90] sm:$0xff]
    %v73 = vld [vmem:[#allocation5 + $0x98] sm:$0xff]
    %v74 = vld [vmem:[#allocation5 + $0xa0] sm:$0xff]
    %v75 = vld [vmem:[#allocation5 + $0xa8] sm:$0xff]
    %v76 = vld [vmem:[#allocation5 + $0xb0] sm:$0xff]
    %v77 = vld [vmem:[#allocation5 + $0xb8] sm:$0xff]
    %v78 = vld [vmem:[#allocation5 + $0xc0] sm:$0xff]
    %v79 = vld [vmem:[#allocation5 + $0xc8] sm:$0xff]
    %v80 = vld [vmem:[#allocation5 + $0xd0] sm:$0xff]
    %v81 = vld [vmem:[#allocation5 + $0xd8] sm:$0xff]
    %v82 = vld [vmem:[#allocation5 + $0xe0] sm:$0xff]
    %v83 = vld [vmem:[#allocation5 + $0xe8] sm:$0xff]
    %v84 = vld [vmem:[#allocation5 + $0xf0] sm:$0xff]
    %v85 = vld [vmem:[#allocation5 + $0xf8] sm:$0xff]
    %v86 = vld [vmem:[#allocation5 + $0x100] sm:$0xff]
    %v87 = vld [vmem:[#allocation5 + $0x108] sm:$0xff]
    %v88 = vld [vmem:[#allocation5 + $0x110] sm:$0xff]
    %v89 = vld [vmem:[#allocation5 + $0x118] sm:$0xff]
    %v90 = vld [vmem:[#allocation5 + $0x120] sm:$0xff]
    %v91 = vld [vmem:[#allocation5 + $0x128] sm:$0xff]
    %v92 = vld [vmem:[#allocation5 + $0x130] sm:$0xff]
    %v93 = vld [vmem:[#allocation5 + $0x138] sm:$0xff]
    %v94 = vld [vmem:[#allocation5 + $0x140] sm:$0xff]
    %v95 = vld [vmem:[#allocation5 + $0x148] sm:$0xff]
    %v96 = vld [vmem:[#allocation5 + $0x150] sm:$0xff]
    %v97 = vld [vmem:[#allocation5 + $0x158] sm:$0xff]
    %v98 = vld [vmem:[#allocation5 + $0x160] sm:$0xff]
    %v99 = vld [vmem:[#allocation5 + $0x168] sm:$0xff]
    %v100 = vld [vmem:[#allocation5 + $0x170] sm:$0xff]
    %v101 = vld [vmem:[#allocation5 + $0x178] sm:$0xff]
    %102 = vmatprep.subr.mxu0 %v55
    %103 = vmatpush1.msra.mxu0 %v54
    %104 = vmatprep.subr.mxu0 %v58
    %105 = vmatpush1.msra.mxu0 %v57
    %106 = vmatprep.subr.mxu0 %v61
    %107 = vmatpush1.msra.mxu0 %v60
    %108 = vmatprep.subr.mxu0 %v64
    %109 = vmatpush1.msra.mxu0 %v63
    %110 = vmatprep.subr.mxu0 %v67
    %111 = vmatpush1.msra.mxu0 %v66
    %112 = vmatprep.subr.mxu0 %v70
    %113 = vmatpush1.msra.mxu0 %v69
    %114 = vmatprep.subr.mxu0 %v73
    %115 = vmatpush1.msra.mxu0 %v72
    %116 = vmatprep.subr.mxu0 %v76
    %117 = vmatpush1.msra.mxu0 %v75
    %118 = vmatprep.subr.mxu0 %v79
    %119 = vmatpush1.msra.mxu0 %v78
    %120 = vmatprep.subr.mxu0 %v82
    %121 = vmatpush1.msra.mxu0 %v81
    %122 = vmatprep.subr.mxu0 %v85
    %123 = vmatpush1.msra.mxu0 %v84
    %124 = vmatprep.subr.mxu0 %v88
    %125 = vmatpush1.msra.mxu0 %v87
    %126 = vmatprep.subr.mxu0 %v91
    %127 = vmatpush1.msra.mxu0 %v90
    %128 = vmatprep.subr.mxu0 %v94
    %129 = vmatpush1.msra.mxu0 %v93
    %130 = vmatprep.subr.mxu0 %v97
    %131 = vmatpush1.msra.mxu0 %v96
    %132 = vmatprep.subr.mxu0 %v100
    %133 = vmatpush1.msra.mxu0 %v99
    %134 = vmatprep.subr.mxu0 0.0
    %135 = vmatpush1.msra.mxu0 0.0
    %136 = vmatprep.subr.mxu0 0.0
    %137 = vmatpush1.msra.mxu0 0.0
    %138 = vmatprep.subr.mxu0 0.0
    %139 = vmatpush1.msra.mxu0 0.0
    %140 = vmatprep.subr.mxu0 0.0
    %141 = vmatpush1.msra.mxu0 0.0
    %142 = vmatprep.subr.mxu0 0.0
    %143 = vmatpush1.msra.mxu0 0.0
    %144 = vmatprep.subr.mxu0 0.0
    %145 = vmatpush1.msra.mxu0 0.0
    %146 = vmatprep.subr.mxu0 0.0
    %147 = vmatpush1.msra.mxu0 0.0
    %148 = vmatprep.subr.mxu0 0.0
    %149 = vmatpush1.msra.mxu0 0.0
    %150 = vmatprep.subr.mxu0 0.0
    %151 = vmatpush1.msra.mxu0 0.0
    %152 = vmatprep.subr.mxu0 0.0
    %153 = vmatpush1.msra.mxu0 0.0
    %154 = vmatprep.subr.mxu0 0.0
    %155 = vmatpush1.msra.mxu0 0.0
    %156 = vmatprep.subr.mxu0 0.0
    %157 = vmatpush1.msra.mxu0 0.0
    %158 = vmatprep.subr.mxu0 0.0
    %159 = vmatpush1.msra.mxu0 0.0
    %160 = vmatprep.subr.mxu0 0.0
    %161 = vmatpush1.msra.mxu0 0.0
    %162 = vmatprep.subr.mxu0 0.0
    %163 = vmatpush1.msra.mxu0 0.0
    %164 = vmatprep.subr.mxu0 0.0
    %165 = vmatpush1.msra.mxu0 0.0
    %166 = vmatprep.mubr.f32.mxu0 0.0
    %167 = vmatmul.mubr.f32.gmra.mrb[0].mxu0 %v46
    %v168 = vpop.f32.mrb[0].mxu0
    %v169 = vadd.f32 0.0, %v168
    %v170 = vpop.f32.mrb[0].mxu0
    %v171 = vadd.f32 0.0, %v170
    %172 = vmatprep.mubr.f32.mxu0 0.0
    %173 = vmatmul.mubr.f32.gmra.mrb[0].mxu0 %v47
    %v174 = vpop.f32.mrb[0].mxu0
    %v175 = vadd.f32 0.0, %v174
    %v176 = vpop.f32.mrb[0].mxu0
    %v177 = vadd.f32 0.0, %v176
    %178 = vmatprep.mubr.f32.mxu0 0.0
    %179 = vmatmul.mubr.f32.gmra.mrb[0].mxu0 %v48
    %v180 = vpop.f32.mrb[0].mxu0
    %v181 = vadd.f32 0.0, %v180
    %v182 = vpop.f32.mrb[0].mxu0
    %v183 = vadd.f32 0.0, %v182
    %184 = vmatprep.mubr.f32.mxu0 0.0
    %185 = vmatmul.mubr.f32.gmra.mrb[0].mxu0 %v49
    %v186 = vpop.f32.mrb[0].mxu0
    %v187 = vadd.f32 0.0, %v186
    %v188 = vpop.f32.mrb[0].mxu0
    %v189 = vadd.f32 0.0, %v188
    %190 = vmatprep.mubr.f32.mxu0 0.0
    %191 = vmatmul.mubr.f32.gmra.mrb[0].mxu0 %v50
    %v192 = vpop.f32.mrb[0].mxu0
    %v193 = vadd.f32 0.0, %v192
    %v194 = vpop.f32.mrb[0].mxu0
    %v195 = vadd.f32 0.0, %v194
    %196 = vmatprep.mubr.f32.mxu0 0.0
    %197 = vmatmul.mubr.f32.gmra.mrb[0].mxu0 %v51
    %v198 = vpop.f32.mrb[0].mxu0
    %v199 = vadd.f32 0.0, %v198
    %v200 = vpop.f32.mrb[0].mxu0
    %v201 = vadd.f32 0.0, %v200
    %202 = vmatprep.mubr.f32.mxu0 0.0
    %203 = vmatmul.mubr.f32.gmra.mrb[0].mxu0 %v52
    %v204 = vpop.f32.mrb[0].mxu0
    %v205 = vadd.f32 0.0, %v204
    %v206 = vpop.f32.mrb[0].mxu0
    %v207 = vadd.f32 0.0, %v206
    %208 = vmatprep.mubr.f32.mxu0 0.0
    %209 = vmatmul.mubr.f32.gmra.mrb[0].mxu0 %v53
    %v210 = vpop.f32.mrb[0].mxu0
    %v211 = vadd.f32 0.0, %v210
    %v212 = vpop.f32.mrb[0].mxu0
    %v213 = vadd.f32 0.0, %v212
    %214 = vdwg.mxu0
    %215 = vmatprep.subr.mxu0 0.0
    %216 = vmatpush1.msra.mxu0 %v56
    %217 = vmatprep.subr.mxu0 0.0
    %218 = vmatpush1.msra.mxu0 %v59
    %219 = vmatprep.subr.mxu0 0.0
    %220 = vmatpush1.msra.mxu0 %v62
    %221 = vmatprep.subr.mxu0 0.0
    %222 = vmatpush1.msra.mxu0 %v65
    %223 = vmatprep.subr.mxu0 0.0
    %224 = vmatpush1.msra.mxu0 %v68
    %225 = vmatprep.subr.mxu0 0.0
    %226 = vmatpush1.msra.mxu0 %v71
    %227 = vmatprep.subr.mxu0 0.0
    %228 = vmatpush1.msra.mxu0 %v74
    %229 = vmatprep.subr.mxu0 0.0
    %230 = vmatpush1.msra.mxu0 %v77
    %231 = vmatprep.subr.mxu0 0.0
    %232 = vmatpush1.msra.mxu0 %v80
    %233 = vmatprep.subr.mxu0 0.0
    %234 = vmatpush1.msra.mxu0 %v83
    %235 = vmatprep.subr.mxu0 0.0
    %236 = vmatpush1.msra.mxu0 %v86
    %237 = vmatprep.subr.mxu0 0.0
    %238 = vmatpush1.msra.mxu0 %v89
    %239 = vmatprep.subr.mxu0 0.0
    %240 = vmatpush1.msra.mxu0 %v92
    %241 = vmatprep.subr.mxu0 0.0
    %242 = vmatpush1.msra.mxu0 %v95
    %243 = vmatprep.subr.mxu0 0.0
    %244 = vmatpush1.msra.mxu0 %v98
    %245 = vmatprep.subr.mxu0 0.0
    %246 = vmatpush1.msra.mxu0 %v101
    %247 = vmatprep.subr.mxu0 0.0
    %248 = vmatpush1.msra.mxu0 0.0
    %249 = vmatprep.subr.mxu0 0.0
    %250 = vmatpush1.msra.mxu0 0.0
    %251 = vmatprep.subr.mxu0 0.0
    %252 = vmatpush1.msra.mxu0 0.0
    %253 = vmatprep.subr.mxu0 0.0
    %254 = vmatpush1.msra.mxu0 0.0
    %255 = vmatprep.subr.mxu0 0.0
    %256 = vmatpush1.msra.mxu0 0.0
    %257 = vmatprep.subr.mxu0 0.0
    %258 = vmatpush1.msra.mxu0 0.0
    %259 = vmatprep.subr.mxu0 0.0
    %260 = vmatpush1.msra.mxu0 0.0
    %261 = vmatprep.subr.mxu0 0.0
    %262 = vmatpush1.msra.mxu0 0.0
    %263 = vmatprep.subr.mxu0 0.0
    %264 = vmatpush1.msra.mxu0 0.0
    %265 = vmatprep.subr.mxu0 0.0
    %266 = vmatpush1.msra.mxu0 0.0
    %267 = vmatprep.subr.mxu0 0.0
    %268 = vmatpush1.msra.mxu0 0.0
    %269 = vmatprep.subr.mxu0 0.0
    %270 = vmatpush1.msra.mxu0 0.0
    %271 = vmatprep.subr.mxu0 0.0
    %272 = vmatpush1.msra.mxu0 0.0
    %273 = vmatprep.subr.mxu0 0.0
    %274 = vmatpush1.msra.mxu0 0.0
    %275 = vmatprep.subr.mxu0 0.0
    %276 = vmatpush1.msra.mxu0 0.0
    %277 = vmatprep.subr.mxu0 0.0
    %278 = vmatpush1.msra.mxu0 0.0
    %279 = vmatprep.mubr.f32.mxu0 0.0
    %280 = vmatmul.mubr.f32.gmra.mrb[0].mxu0 %v46
    %v281 = vpop.f32.mrb[0].mxu0
    %v282 = vadd.f32 0.0, %v281
    %v283 = vpop.f32.mrb[0].mxu0
    %284 = vmatprep.mubr.f32.mxu0 0.0
    %285 = vmatmul.mubr.f32.gmra.mrb[0].mxu0 %v47
    %v286 = vpop.f32.mrb[0].mxu0
    %v287 = vadd.f32 0.0, %v286
    %v288 = vpop.f32.mrb[0].mxu0
    %289 = vmatprep.mubr.f32.mxu0 0.0
    %290 = vmatmul.mubr.f32.gmra.mrb[0].mxu0 %v48
    %v291 = vpop.f32.mrb[0].mxu0
    %v292 = vadd.f32 0.0, %v291
    %v293 = vpop.f32.mrb[0].mxu0
    %294 = vmatprep.mubr.f32.mxu0 0.0
    %295 = vmatmul.mubr.f32.gmra.mrb[0].mxu0 %v49
    %v296 = vpop.f32.mrb[0].mxu0
    %v297 = vadd.f32 0.0, %v296
    %v298 = vpop.f32.mrb[0].mxu0
    %299 = vmatprep.mubr.f32.mxu0 0.0
    %300 = vmatmul.mubr.f32.gmra.mrb[0].mxu0 %v50
    %v301 = vpop.f32.mrb[0].mxu0
    %v302 = vadd.f32 0.0, %v301
    %v303 = vpop.f32.mrb[0].mxu0
    %304 = vmatprep.mubr.f32.mxu0 0.0
    %305 = vmatmul.mubr.f32.gmra.mrb[0].mxu0 %v51
    %v306 = vpop.f32.mrb[0].mxu0
    %v307 = vadd.f32 0.0, %v306
    %v308 = vpop.f32.mrb[0].mxu0
    %309 = vmatprep.mubr.f32.mxu0 0.0
    %310 = vmatmul.mubr.f32.gmra.mrb[0].mxu0 %v52
    %v311 = vpop.f32.mrb[0].mxu0
    %v312 = vadd.f32 0.0, %v311
    %v313 = vpop.f32.mrb[0].mxu0
    %314 = vmatprep.mubr.f32.mxu0 0.0
    %315 = vmatmul.mubr.f32.gmra.mrb[0].mxu0 %v53
    %v316 = vpop.f32.mrb[0].mxu0
    %v317 = vadd.f32 0.0, %v316
    %v318 = vpop.f32.mrb[0].mxu0
    %319 = vdwg.mxu0
    %v320 = vld [vmem:[%s2] sm:$0x7]
    %v321 = vld [vmem:[%s3] sm:$0x7]
    %v322 = vadd.f32 %v169, %v175
    %v323 = vadd.f32 %v322, %v181
    %v324 = vadd.f32 %v323, %v187
    %v325 = vadd.f32 %v324, %v193
    %v326 = vadd.f32 %v325, %v199
    %v327 = vadd.f32 %v326, %v205
    %v328 = vadd.f32 %v327, %v211
    %v329 = vrot.slane %v328, 4
    %v330 = vadd.f32 %v328, %v329
    %v331 = vrot.slane %v330, 2
    %v332 = vadd.f32 %v330, %v331
    %v333 = vrot.slane %v332, 1
    %v334 = vadd.f32 %v332, %v333
    %v335 = vadd.f32 %v171, %v177
    %v336 = vadd.f32 %v335, %v183
    %v337 = vadd.f32 %v336, %v189
    %v338 = vadd.f32 %v337, %v195
    %v339 = vadd.f32 %v338, %v201
    %v340 = vadd.f32 %v339, %v207
    %v341 = vadd.f32 %v340, %v213
    %v342 = vrot.slane %v341, 4
    %v343 = vadd.f32 %v341, %v342
    %v344 = vrot.slane %v343, 2
    %v345 = vadd.f32 %v343, %v344
    %v346 = vrot.slane %v345, 1
    %v347 = vadd.f32 %v345, %v346
    %v348 = vadd.f32 %v282, %v287
    %v349 = vadd.f32 %v348, %v292
    %v350 = vadd.f32 %v349, %v297
    %v351 = vadd.f32 %v350, %v302
    %v352 = vadd.f32 %v351, %v307
    %v353 = vadd.f32 %v352, %v312
    %v354 = vadd.f32 %v353, %v317
    %v355 = vrot.slane %v354, 4
    %v356 = vadd.f32 %v354, %v355
    %v357 = vrot.slane %v356, 2
    %v358 = vadd.f32 %v356, %v357
    %v359 = vrot.slane %v358, 1
    %v360 = vadd.f32 %v358, %v359
    %v361 = vmul.f32 %v334, 0.015625
    %v362 = vmul.f32 %v347, 0.015625
    %v363 = vmul.f32 %v360, 0.015625
    %v364 = vmul.f32 %v169, %v169
    %v365 = vmul.f32 %v171, %v171
    %v366 = vmul.f32 %v282, %v282
    %v367 = vmul.f32 %v175, %v175
    %v368 = vmul.f32 %v177, %v177
    %v369 = vmul.f32 %v287, %v287
    %v370 = vmul.f32 %v181, %v181
    %v371 = vmul.f32 %v183, %v183
    %v372 = vmul.f32 %v292, %v292
    %v373 = vmul.f32 %v187, %v187
    %v374 = vmul.f32 %v189, %v189
    %v375 = vmul.f32 %v297, %v297
    %v376 = vmul.f32 %v193, %v193
    %v377 = vmul.f32 %v195, %v195
    %v378 = vmul.f32 %v302, %v302
    %v379 = vmul.f32 %v199, %v199
    %v380 = vmul.f32 %v201, %v201
    %v381 = vmul.f32 %v307, %v307
    %v382 = vmul.f32 %v205, %v205
    %v383 = vmul.f32 %v207, %v207
    %v384 = vmul.f32 %v312, %v312
    %v385 = vmul.f32 %v211, %v211
    %v386 = vmul.f32 %v213, %v213
    %v387 = vmul.f32 %v317, %v317
    %v388 = vadd.f32 %v364, %v367
    %v389 = vadd.f32 %v388, %v370
    %v390 = vadd.f32 %v389, %v373
    %v391 = vadd.f32 %v390, %v376
    %v392 = vadd.f32 %v391, %v379
    %v393 = vadd.f32 %v392, %v382
    %v394 = vadd.f32 %v393, %v385
    %v395 = vrot.slane %v394, 4
    %v396 = vadd.f32 %v394, %v395
    %v397 = vrot.slane %v396, 2
    %v398 = vadd.f32 %v396, %v397
    %v399 = vrot.slane %v398, 1
    %v400 = vadd.f32 %v398, %v399
    %v401 = vadd.f32 %v365, %v368
    %v402 = vadd.f32 %v401, %v371
    %v403 = vadd.f32 %v402, %v374
    %v404 = vadd.f32 %v403, %v377
    %v405 = vadd.f32 %v404, %v380
    %v406 = vadd.f32 %v405, %v383
    %v407 = vadd.f32 %v406, %v386
    %v408 = vrot.slane %v407, 4
    %v409 = vadd.f32 %v407, %v408
    %v410 = vrot.slane %v409, 2
    %v411 = vadd.f32 %v409, %v410
    %v412 = vrot.slane %v411, 1
    %v413 = vadd.f32 %v411, %v412
    %v414 = vadd.f32 %v366, %v369
    %v415 = vadd.f32 %v414, %v372
    %v416 = vadd.f32 %v415, %v375
    %v417 = vadd.f32 %v416, %v378
    %v418 = vadd.f32 %v417, %v381
    %v419 = vadd.f32 %v418, %v384
    %v420 = vadd.f32 %v419, %v387
    %v421 = vrot.slane %v420, 4
    %v422 = vadd.f32 %v420, %v421
    %v423 = vrot.slane %v422, 2
    %v424 = vadd.f32 %v422, %v423
    %v425 = vrot.slane %v424, 1
    %v426 = vadd.f32 %v424, %v425
    %v427 = vmul.f32 %v400, 0.015625
    %v428 = vmul.f32 %v413, 0.015625
    %v429 = vmul.f32 %v426, 0.015625
    %v430 = vmul.f32 %v361, %v361
    %v431 = vmul.f32 %v362, %v362
    %v432 = vmul.f32 %v363, %v363
    %v433 = vsub.f32 %v427, %v430
    %v434 = vsub.f32 %v428, %v431
    %v435 = vsub.f32 %v429, %v432
    %v436 = vmax.f32 %v433, 0.0
    %v437 = vmax.f32 %v434, 0.0
    %v438 = vmax.f32 %v435, 0.0
    %v439 = vadd.f32 %v436, 1e-05
    %v440 = vadd.f32 %v437, 1e-05
    %v441 = vadd.f32 %v438, 1e-05
    %v442 = vrsqrt.pop %v439
    %v443 = vrsqrt.pop %v440
    %v444 = vrsqrt.pop %v441
    %v448 = vcombine.low %v442, %v443
    %v450 = vunpack.c.l.s4 1966171168
    %v451 = vunpack.c.0.s8 %v450
    %v452 = vlaneseq
    %v453 = vshrl.u32 %v452, 7
    %v454 = vsub.s32 %v451, %v453
    %v455 = vrot.slane %v448, %v454
    %v457 = vunpack.c.l.s4 1966171168
    %v458 = vunpack.c.0.s8 %v457
    %v459 = vlaneseq
    %v460 = vshrl.u32 %v459, 7
    %v461 = vsub.s32 %v458, %v460
    %v462 = vrot.slane %v444, %v461
    %v463 = vcombine.low %v455, %v462
    %v465 = vunpack.c.l.s4 1966171168
    %v466 = vunpack.c.0.s8 %v465
    %v467 = vlaneseq
    %v468 = vshrl.u32 %v467, 7
    %v469 = vsub.s32 %v466, %v468
    %v470 = vrot.slane %v463, %v469
    %v472 = vmul.f32 %v320, %v470
    %v474 = vlaneseq
    %v475 = vshrl.u32 %v474, 7
    %v476 = vsub.s32 0, %v475
    %v477 = vrot.slane %v472, %v476
    %v478 = vlaneseq
    %v479 = vshrl.u32 %v478, 7
    %v480 = vsub.s32 1, %v479
    %v481 = vrot.slane %v472, %v480
    %v482 = vlaneseq
    %v483 = vshrl.u32 %v482, 7
    %v484 = vsub.s32 2, %v483
    %v485 = vrot.slane %v472, %v484
    %v489 = vmul.f32 %v361, %v477
    %v490 = vmul.f32 %v362, %v481
    %v491 = vmul.f32 %v363, %v485
    %v495 = vcombine.low %v489, %v490
    %v497 = vunpack.c.l.s4 1966171168
    %v498 = vunpack.c.0.s8 %v497
    %v499 = vlaneseq
    %v500 = vshrl.u32 %v499, 7
    %v501 = vsub.s32 %v498, %v500
    %v502 = vrot.slane %v495, %v501
    %v504 = vunpack.c.l.s4 1966171168
    %v505 = vunpack.c.0.s8 %v504
    %v506 = vlaneseq
    %v507 = vshrl.u32 %v506, 7
    %v508 = vsub.s32 %v505, %v507
    %v509 = vrot.slane %v491, %v508
    %v510 = vcombine.low %v502, %v509
    %v512 = vunpack.c.l.s4 1966171168
    %v513 = vunpack.c.0.s8 %v512
    %v514 = vlaneseq
    %v515 = vshrl.u32 %v514, 7
    %v516 = vsub.s32 %v513, %v515
    %v517 = vrot.slane %v510, %v516
    %v519 = vsub.f32 %v321, %v517
    %v520 = vmul.f32 %v169, %v477
    %v521 = vmul.f32 %v171, %v481
    %v522 = vmul.f32 %v282, %v485
    %v523 = vmul.f32 %v175, %v477
    %v524 = vmul.f32 %v177, %v481
    %v525 = vmul.f32 %v287, %v485
    %v526 = vmul.f32 %v181, %v477
    %v527 = vmul.f32 %v183, %v481
    %v528 = vmul.f32 %v292, %v485
    %v529 = vmul.f32 %v187, %v477
    %v530 = vmul.f32 %v189, %v481
    %v531 = vmul.f32 %v297, %v485
    %v532 = vmul.f32 %v193, %v477
    %v533 = vmul.f32 %v195, %v481
    %v534 = vmul.f32 %v302, %v485
    %v535 = vmul.f32 %v199, %v477
    %v536 = vmul.f32 %v201, %v481
    %v537 = vmul.f32 %v307, %v485
    %v538 = vmul.f32 %v205, %v477
    %v539 = vmul.f32 %v207, %v481
    %v540 = vmul.f32 %v312, %v485
    %v541 = vmul.f32 %v211, %v477
    %v542 = vmul.f32 %v213, %v481
    %v543 = vmul.f32 %v317, %v485
    %v545 = vlaneseq
    %v546 = vshrl.u32 %v545, 7
    %v547 = vsub.s32 0, %v546
    %v548 = vrot.slane %v519, %v547
    %v549 = vlaneseq
    %v550 = vshrl.u32 %v549, 7
    %v551 = vsub.s32 1, %v550
    %v552 = vrot.slane %v519, %v551
    %v553 = vlaneseq
    %v554 = vshrl.u32 %v553, 7
    %v555 = vsub.s32 2, %v554
    %v556 = vrot.slane %v519, %v555
    %v560 = vadd.f32 %v520, %v548
    %v561 = vadd.f32 %v521, %v552
    %v562 = vadd.f32 %v522, %v556
    %v563 = vadd.f32 %v523, %v548
    %v564 = vadd.f32 %v524, %v552
    %v565 = vadd.f32 %v525, %v556
    %v566 = vadd.f32 %v526, %v548
    %v567 = vadd.f32 %v527, %v552
    %v568 = vadd.f32 %v528, %v556
    %v569 = vadd.f32 %v529, %v548
    %v570 = vadd.f32 %v530, %v552
    %v571 = vadd.f32 %v531, %v556
    %v572 = vadd.f32 %v532, %v548
    %v573 = vadd.f32 %v533, %v552
    %v574 = vadd.f32 %v534, %v556
    %v575 = vadd.f32 %v535, %v548
    %v576 = vadd.f32 %v536, %v552
    %v577 = vadd.f32 %v537, %v556
    %v578 = vadd.f32 %v538, %v548
    %v579 = vadd.f32 %v539, %v552
    %v580 = vadd.f32 %v540, %v556
    %v581 = vadd.f32 %v541, %v548
    %v582 = vadd.f32 %v542, %v552
    %v583 = vadd.f32 %v543, %v556
    %vm584 = vcmp.ge.f32.partialorder %v560, 0.0
    %vm585 = vcmp.ge.f32.partialorder %v561, 0.0
    %vm586 = vcmp.ge.f32.partialorder %v562, 0.0
    %vm587 = vcmp.ge.f32.partialorder %v563, 0.0
    %vm588 = vcmp.ge.f32.partialorder %v564, 0.0
    %vm589 = vcmp.ge.f32.partialorder %v565, 0.0
    %vm590 = vcmp.ge.f32.partialorder %v566, 0.0
    %vm591 = vcmp.ge.f32.partialorder %v567, 0.0
    %vm592 = vcmp.ge.f32.partialorder %v568, 0.0
    %vm593 = vcmp.ge.f32.partialorder %v569, 0.0
    %vm594 = vcmp.ge.f32.partialorder %v570, 0.0
    %vm595 = vcmp.ge.f32.partialorder %v571, 0.0
    %vm596 = vcmp.ge.f32.partialorder %v572, 0.0
    %vm597 = vcmp.ge.f32.partialorder %v573, 0.0
    %vm598 = vcmp.ge.f32.partialorder %v574, 0.0
    %vm599 = vcmp.ge.f32.partialorder %v575, 0.0
    %vm600 = vcmp.ge.f32.partialorder %v576, 0.0
    %vm601 = vcmp.ge.f32.partialorder %v577, 0.0
    %vm602 = vcmp.ge.f32.partialorder %v578, 0.0
    %vm603 = vcmp.ge.f32.partialorder %v579, 0.0
    %vm604 = vcmp.ge.f32.partialorder %v580, 0.0
    %vm605 = vcmp.ge.f32.partialorder %v581, 0.0
    %vm606 = vcmp.ge.f32.partialorder %v582, 0.0
    %vm607 = vcmp.ge.f32.partialorder %v583, 0.0
    %v608 = vmul.f32 %v560, 0.01
    %v609 = vmul.f32 %v561, 0.01
    %v610 = vmul.f32 %v562, 0.01
    %v611 = vmul.f32 %v563, 0.01
    %v612 = vmul.f32 %v564, 0.01
    %v613 = vmul.f32 %v565, 0.01
    %v614 = vmul.f32 %v566, 0.01
    %v615 = vmul.f32 %v567, 0.01
    %v616 = vmul.f32 %v568, 0.01
    %v617 = vmul.f32 %v569, 0.01
    %v618 = vmul.f32 %v570, 0.01
    %v619 = vmul.f32 %v571, 0.01
    %v620 = vmul.f32 %v572, 0.01
    %v621 = vmul.f32 %v573, 0.01
    %v622 = vmul.f32 %v574, 0.01
    %v623 = vmul.f32 %v575, 0.01
    %v624 = vmul.f32 %v576, 0.01
    %v625 = vmul.f32 %v577, 0.01
    %v626 = vmul.f32 %v578, 0.01
    %v627 = vmul.f32 %v579, 0.01
    %v628 = vmul.f32 %v580, 0.01
    %v629 = vmul.f32 %v581, 0.01
    %v630 = vmul.f32 %v582, 0.01
    %v631 = vmul.f32 %v583, 0.01
    %v632 = vsel %vm584, %v560, %v608
    %v633 = vsel %vm585, %v561, %v609
    %v634 = vsel %vm586, %v562, %v610
    %v635 = vsel %vm587, %v563, %v611
    %v636 = vsel %vm588, %v564, %v612
    %v637 = vsel %vm589, %v565, %v613
    %v638 = vsel %vm590, %v566, %v614
    %v639 = vsel %vm591, %v567, %v615
    %v640 = vsel %vm592, %v568, %v616
    %v641 = vsel %vm593, %v569, %v617
    %v642 = vsel %vm594, %v570, %v618
    %v643 = vsel %vm595, %v571, %v619
    %v644 = vsel %vm596, %v572, %v620
    %v645 = vsel %vm597, %v573, %v621
    %v646 = vsel %vm598, %v574, %v622
    %v647 = vsel %vm599, %v575, %v623
    %v648 = vsel %vm600, %v576, %v624
    %v649 = vsel %vm601, %v577, %v625
    %v650 = vsel %vm602, %v578, %v626
    %v651 = vsel %vm603, %v579, %v627
    %v652 = vsel %vm604, %v580, %v628
    %v653 = vsel %vm605, %v581, %v629
    %v654 = vsel %vm606, %v582, %v630
    %v655 = vsel %vm607, %v583, %v631
    %656 = vst [vmem:[#allocation7] sm:$0xff] %v632
    %657 = vst [vmem:[#allocation7 + $0x8] sm:$0xff] %v633
    %658 = vst [vmem:[#allocation7 + $0x10] sm:$0xff] %v634
    %659 = vst [vmem:[#allocation7 + $0x18] sm:$0xff] %v635
    %660 = vst [vmem:[#allocation7 + $0x20] sm:$0xff] %v636
    %661 = vst [vmem:[#allocation7 + $0x28] sm:$0xff] %v637
    %662 = vst [vmem:[#allocation7 + $0x30] sm:$0xff] %v638
    %663 = vst [vmem:[#allocation7 + $0x38] sm:$0xff] %v639
    %664 = vst [vmem:[#allocation7 + $0x40] sm:$0xff] %v640
    %665 = vst [vmem:[#allocation7 + $0x48] sm:$0xff] %v641
    %666 = vst [vmem:[#allocation7 + $0x50] sm:$0xff] %v642
    %667 = vst [vmem:[#allocation7 + $0x58] sm:$0xff] %v643
    %668 = vst [vmem:[#allocation7 + $0x60] sm:$0xff] %v644
    %669 = vst [vmem:[#allocation7 + $0x68] sm:$0xff] %v645
    %670 = vst [vmem:[#allocation7 + $0x70] sm:$0xff] %v646
    %671 = vst [vmem:[#allocation7 + $0x78] sm:$0xff] %v647
    %672 = vst [vmem:[#allocation7 + $0x80] sm:$0xff] %v648
    %673 = vst [vmem:[#allocation7 + $0x88] sm:$0xff] %v649
    %674 = vst [vmem:[#allocation7 + $0x90] sm:$0xff] %v650
    %675 = vst [vmem:[#allocation7 + $0x98] sm:$0xff] %v651
    %676 = vst [vmem:[#allocation7 + $0xa0] sm:$0xff] %v652
    %677 = vst [vmem:[#allocation7 + $0xa8] sm:$0xff] %v653
    %678 = vst [vmem:[#allocation7 + $0xb0] sm:$0xff] %v654
    %679 = vst [vmem:[#allocation7 + $0xb8] sm:$0xff] %v655
    // Predicated region
    $region26: #{tpu_custom_call.1} parent=1 // pred_check
      _
    $region27: #{tpu_custom_call.1} parent=1 // pred_check_branch
      %681 = sbr.rel (0) target = $region29
    $region28: #{tpu_custom_call.1} parent=1 // pred_region
      %s683 = ssub.s32 3072, 3072
      %684 = vsyncadd [#allocation4], %s683
      %s685 = sshll.u32 [#allocation7], 4
      %s686 = int_to_ptr.vmem [resolvable:$true] %s685
      %691 = dma.vmem_to_hbm [thread:$0]  %s686, 3072, %s4, [#allocation4], 384, 384, 24
    $region29: #{tpu_custom_call.1} parent=1 // pred_fallthru
      _
    // Predicated region
    $region30: #{tpu_custom_call.1} parent=1 // pred_check
      _
    $region31: #{tpu_custom_call.1} parent=1 // pred_check_branch
      %693 = sbr.rel (0) target = $region33
    $region32: #{tpu_custom_call.1} parent=1 // pred_region
      %694 = dma.done [#allocation4], 3072
    $region33: #{tpu_custom_call.1} parent=1 // pred_fallthru
      _
    %695 = vsyncpa [#allocation3], 1
    %696 = vsyncpa [#allocation6], 1
    %697 = vsyncpa [#allocation4], 1

</llo_original>
